<compile_context>
chip_gen: v7x
topology: tpu7x:2x2x1
jax: 0.10.0
libtpu: 0.0.40
codegen_flags: <defaults>
</compile_context>

<pallas_src>
import jax
import jax.numpy as jnp
from jax import lax
from jax.experimental import pallas as pl
from jax.experimental.pallas import tpu as pltpu


def net_kernel(x_ref, w_ih_ref, b_ref, w_hh_ref, w_cls_ref, b_cls_ref,
               out_ref, gi_ref, h_ref):
    """LSTM recurrence (fused gate order i,f,o,g) + Linear(H,1) head.

    x_ref     : (S, B)   f32  SMEM   raw input sequence (input_size == 1)
    w_ih_ref  : (1, 4H)  f32  VMEM   fused input weights  (permuted i,f,o,g)
    b_ref     : (1, 4H)  f32  VMEM   fused bias b_ih + b_hh (permuted)
    w_hh_ref  : (H, 4H)  f32  VMEM   fused recurrent weights, used as h @ W
    w_cls_ref : (1, H)   f32  VMEM   classifier weight
    b_cls_ref : (1,)     f32  SMEM   classifier bias (scalar)
    out_ref   : (S, B)   f32  VMEM   output
    gi_ref    : (S, B, 4H) f32 VMEM scratch  precomputed gate inputs
    h_ref     : (S, B, H)  f32 VMEM scratch  per-step hidden states
    """
    S, B = out_ref.shape
    H = w_cls_ref.shape[1]
    H3 = 3 * H

    # Hoist weight loads out of the loops (vreg-resident).
    w_ih = w_ih_ref[...]          # (1, 4H)
    bias = b_ref[...]             # (1, 4H)
    w_hh = w_hh_ref[...]          # (H, 4H)
    w_cls = w_cls_ref[...]        # (1, H)
    b_cls = b_cls_ref[0]          # scalar

    # ---- Phase 1: gate-input precompute (no dependence on h/c, so never on
    # the recurrence critical path).  gate_in[t, b, :] = x[t, b] * w_ih + bias.
    # Scalar-splat per (t, b) row avoids any in-kernel lane<->sublane relayout
    # of x; S*B is tiny here.
    # TODO(synk): for large S*B, vectorize this (stream x as (chunk, B, 1)
    # blocks via BlockSpec so the 4H broadcast is a pure lane-broadcast).
    for t in range(S):
        for bi in range(B):
            gi_ref[t, pl.ds(bi, 1), :] = x_ref[t, bi] * w_ih + bias

    # ---- Phase 2: serial LSTM recurrence; h/c live in vregs as the carry.
    def step(t, carry):
        h, c = carry                                           # (B, H) each
        # Single fused gate matmul: (B, H) @ (H, 4H) -> (B, 4H); 4H = 128 lanes.
        gates = jnp.dot(h, w_hh, preferred_element_type=jnp.float32)
        gates = gates + gi_ref[t]                              # (B, 4H)

        sig = jax.nn.sigmoid(gates[:, :H3])                    # i | f | o
        g = jnp.tanh(gates[:, H3:])                            # g
        i = sig[:, :H]
        f = sig[:, H:2 * H]
        o = sig[:, 2 * H:H3]

        c_new = f * c + i * g
        h_new = o * jnp.tanh(c_new)

        h_ref[t] = h_new            # store is off the h/c dependency chain
        return (h_new, c_new)

    zeros = jnp.zeros((B, H), jnp.float32)
    lax.fori_loop(0, S, step, (zeros, zeros), unroll=True)     # S is small/static

    # ---- Phase 3: classifier applied once, after the recurrence (no MXU
    # pop / masked store inside the serial loop).
    for t in range(S):
        y_t = lax.dot_general(w_cls, h_ref[t], (((1,), (1,)), ((), ())),
                              preferred_element_type=jnp.float32)   # (1, B)
        out_ref[pl.ds(t, 1), :] = y_t + b_cls


def net_forward(x, packed):
    """x: (seq_len, batch) f32 -> (seq_len, batch) f32.  No wrapper-side math."""
    S, B = x.shape
    H = packed["w_cls"].shape[1]

    vmem = pl.BlockSpec(memory_space=pltpu.MemorySpace.VMEM)
    smem = pl.BlockSpec(memory_space=pltpu.MemorySpace.SMEM)

    return pl.pallas_call(
        net_kernel,
        out_shape=jax.ShapeDtypeStruct((S, B), jnp.float32),
        in_specs=[smem, vmem, vmem, vmem, vmem, smem],
        out_specs=vmem,
        scratch_shapes=[
            pltpu.VMEM((S, B, 4 * H), jnp.float32),   # gate inputs
            pltpu.VMEM((S, B, H), jnp.float32),       # hidden states
        ],
        compiler_params=pltpu.CompilerParams(
            vmem_limit_bytes=32 * 1024 * 1024),
    )(x.astype(jnp.float32), packed["w_ih"], packed["b"], packed["w_hh"],
      packed["w_cls"], packed["b_cls"])


def init_params(key, hidden_size):
    """PyTorch-default init U(-1/sqrt(H), 1/sqrt(H)) in PyTorch's native layout.

    weight_ih: (4H, 1), weight_hh: (4H, H), biases: (4H,) — gate order i,f,g,o.
    w_cls: (1, H), b_cls: (1,) — nn.Linear(H, 1).
    """
    H = hidden_size
    bound = 1.0 / float(H) ** 0.5
    ks = jax.random.split(key, 6)
    u = lambda k, shape: jax.random.uniform(k, shape, jnp.float32, -bound, bound)
    return dict(
        weight_ih=u(ks[0], (4 * H, 1)),
        weight_hh=u(ks[1], (4 * H, H)),
        bias_ih=u(ks[2], (4 * H,)),
        bias_hh=u(ks[3], (4 * H,)),
        w_cls=u(ks[4], (1, H)),
        b_cls=u(ks[5], (1,)),
    )


def pack_params(p):
    """Repack PyTorch-layout params into the fused kernel layout (done ONCE,
    outside the jitted forward).

    Gate order is permuted from PyTorch's (i, f, g, o) to (i, f, o, g) so the
    three sigmoid gates are contiguous along the fused 4H axis.
    """
    H = p["weight_hh"].shape[1]
    perm = jnp.concatenate([jnp.arange(0, 2 * H),        # i, f
                            jnp.arange(3 * H, 4 * H),    # o
                            jnp.arange(2 * H, 3 * H)])   # g
    return dict(
        w_ih=p["weight_ih"][:, 0][perm][None, :],            # (1, 4H)
        b=(p["bias_ih"] + p["bias_hh"])[perm][None, :],      # (1, 4H)
        w_hh=p["weight_hh"].T[:, perm],                      # (H, 4H), h @ W form
        w_cls=p["w_cls"],                                    # (1, H)
        b_cls=p["b_cls"],                                    # (1,)
    )


def net_reference(x, p):
    """Pure-JAX f32 reference with PyTorch layout/gate order (for verification)."""
    S, B = x.shape
    H = p["weight_hh"].shape[1]
    W_ih = p["weight_ih"][:, 0]            # (4H,)
    W_hh = p["weight_hh"]                  # (4H, H)
    bias = p["bias_ih"] + p["bias_hh"]

    def step(carry, x_t):                  # x_t: (B,)
        h, c = carry
        gates = (x_t[:, None] * W_ih[None, :]
                 + jnp.dot(h, W_hh.T, precision=lax.Precision.HIGHEST)
                 + bias)                   # (B, 4H), gate order i,f,g,o
        i = jax.nn.sigmoid(gates[:, 0 * H:1 * H])
        f = jax.nn.sigmoid(gates[:, 1 * H:2 * H])
        g = jnp.tanh(gates[:, 2 * H:3 * H])
        o = jax.nn.sigmoid(gates[:, 3 * H:4 * H])
        c = f * c + i * g
        h = o * jnp.tanh(c)
        return (h, c), h

    init = (jnp.zeros((B, H), jnp.float32), jnp.zeros((B, H), jnp.float32))
    _, hs = lax.scan(step, init, x.astype(jnp.float32))        # (S, B, H)
    y = jnp.einsum("sbh,oh->sb", hs, p["w_cls"],
                   precision=lax.Precision.HIGHEST)
    return y + p["b_cls"][0]


if __name__ == "__main__":
    SEQ, BATCH, HIDDEN = 8, 4, 32

    key = jax.random.PRNGKey(0)
    k_x, k_p = jax.random.split(key)
    x = jax.random.normal(k_x, (SEQ, BATCH), jnp.float32)      # (seq_len, batch)
    torch_params = init_params(k_p, HIDDEN)
    packed = pack_params(torch_params)                          # one-time repack

    out = jax.jit(net_forward)(x, packed)
    out = jax.block_until_ready(out)

    ref = net_reference(x, torch_params)
    assert out.shape == (SEQ, BATCH)
    # Tolerance covers default-precision (bf16-pass) MXU matmuls in the kernel
    # vs. the HIGHEST-precision f32 reference; layout/gate-order bugs would
    # give O(0.1) errors.  Note: for much longer sequences the bf16 recurrent
    # matmul drift compounds; use a higher-precision dot if fidelity matters.
    assert jnp.allclose(out, ref, atol=5e-3, rtol=5e-3), (
        float(jnp.max(jnp.abs(out - ref))))
    print("KERNEL_OK")
</pallas_src>

<mosaic_0001>
module attributes {stable_mosaic.version = 11 : i64} {
  func.func @net_kernel(%arg0: memref<8x4xf32, #tpu.memory_space<smem>>, %arg1: memref<1x128xf32, #tpu.memory_space<vmem>>, %arg2: memref<1x128xf32, #tpu.memory_space<vmem>>, %arg3: memref<32x128xf32, #tpu.memory_space<vmem>>, %arg4: memref<1x32xf32, #tpu.memory_space<vmem>>, %arg5: memref<1xf32, #tpu.memory_space<smem>>, %arg6: memref<8x4xf32, #tpu.memory_space<vmem>>, %arg7: memref<8x4x128xf32, #tpu.memory_space<vmem>>, %arg8: memref<8x4x32xf32, #tpu.memory_space<vmem>>) attributes {dimension_semantics = [], scalar_prefetch = 0 : i64, scratch_operands = 2 : i64, tpu.core_type = #tpu.core_type<tc>} {
    %c0 = arith.constant 0 : index
    %c0_0 = arith.constant 0 : index
    %0 = vector.load %arg1[%c0, %c0_0] : memref<1x128xf32, #tpu.memory_space<vmem>>, vector<1x128xf32>
    %c0_1 = arith.constant 0 : index
    %c0_2 = arith.constant 0 : index
    %1 = vector.load %arg2[%c0_1, %c0_2] : memref<1x128xf32, #tpu.memory_space<vmem>>, vector<1x128xf32>
    %c0_3 = arith.constant 0 : index
    %c0_4 = arith.constant 0 : index
    %2 = vector.load %arg3[%c0_3, %c0_4] : memref<32x128xf32, #tpu.memory_space<vmem>>, vector<32x128xf32>
    %c0_5 = arith.constant 0 : index
    %c0_6 = arith.constant 0 : index
    %3 = vector.load %arg4[%c0_5, %c0_6] : memref<1x32xf32, #tpu.memory_space<vmem>>, vector<1x32xf32>
    %c0_7 = arith.constant 0 : index
    %4 = memref.load %arg5[%c0_7] : memref<1xf32, #tpu.memory_space<smem>>
    %c0_8 = arith.constant 0 : index
    %c0_9 = arith.constant 0 : index
    %5 = memref.load %arg0[%c0_8, %c0_9] : memref<8x4xf32, #tpu.memory_space<smem>>
    %6 = vector.broadcast %5 : f32 to vector<1x128xf32>
    %7 = arith.mulf %6, %0 : vector<1x128xf32>
    %8 = arith.addf %7, %1 : vector<1x128xf32>
    %c0_10 = arith.constant 0 : index
    %c0_11 = arith.constant 0 : index
    %c0_12 = arith.constant 0 : index
    %9 = vector.load %arg7[%c0_10, %c0_11, %c0_12] : memref<8x4x128xf32, #tpu.memory_space<vmem>>, vector<1x1x128xf32>
    %10 = vector.shape_cast %9 : vector<1x1x128xf32> to vector<1x128xf32>
    %11 = vector.shape_cast %8 : vector<1x128xf32> to vector<1x1x128xf32>
    tpu.vector_store %arg7[%c0_10, %c0_11, %c0_12], %11 {strides = array<i32>} : memref<8x4x128xf32, #tpu.memory_space<vmem>>, vector<1x1x128xf32>,
    %c0_13 = arith.constant 0 : index
    %c1 = arith.constant 1 : index
    %12 = memref.load %arg0[%c0_13, %c1] : memref<8x4xf32, #tpu.memory_space<smem>>
    %13 = vector.broadcast %12 : f32 to vector<1x128xf32>
    %14 = arith.mulf %13, %0 : vector<1x128xf32>
    %15 = arith.addf %14, %1 : vector<1x128xf32>
    %c0_14 = arith.constant 0 : index
    %c1_15 = arith.constant 1 : index
    %c0_16 = arith.constant 0 : index
    %16 = vector.load %arg7[%c0_14, %c1_15, %c0_16] : memref<8x4x128xf32, #tpu.memory_space<vmem>>, vector<1x1x128xf32>
    %17 = vector.shape_cast %16 : vector<1x1x128xf32> to vector<1x128xf32>
    %18 = vector.shape_cast %15 : vector<1x128xf32> to vector<1x1x128xf32>
    tpu.vector_store %arg7[%c0_14, %c1_15, %c0_16], %18 {strides = array<i32>} : memref<8x4x128xf32, #tpu.memory_space<vmem>>, vector<1x1x128xf32>,
    %c0_17 = arith.constant 0 : index
    %c2 = arith.constant 2 : index
    %19 = memref.load %arg0[%c0_17, %c2] : memref<8x4xf32, #tpu.memory_space<smem>>
    %20 = vector.broadcast %19 : f32 to vector<1x128xf32>
    %21 = arith.mulf %20, %0 : vector<1x128xf32>
    %22 = arith.addf %21, %1 : vector<1x128xf32>
    %c0_18 = arith.constant 0 : index
    %c2_19 = arith.constant 2 : index
    %c0_20 = arith.constant 0 : index
    %23 = vector.load %arg7[%c0_18, %c2_19, %c0_20] : memref<8x4x128xf32, #tpu.memory_space<vmem>>, vector<1x1x128xf32>
    %24 = vector.shape_cast %23 : vector<1x1x128xf32> to vector<1x128xf32>
    %25 = vector.shape_cast %22 : vector<1x128xf32> to vector<1x1x128xf32>
    tpu.vector_store %arg7[%c0_18, %c2_19, %c0_20], %25 {strides = array<i32>} : memref<8x4x128xf32, #tpu.memory_space<vmem>>, vector<1x1x128xf32>,
    %c0_21 = arith.constant 0 : index
    %c3 = arith.constant 3 : index
    %26 = memref.load %arg0[%c0_21, %c3] : memref<8x4xf32, #tpu.memory_space<smem>>
    %27 = vector.broadcast %26 : f32 to vector<1x128xf32>
    %28 = arith.mulf %27, %0 : vector<1x128xf32>
    %29 = arith.addf %28, %1 : vector<1x128xf32>
    %c0_22 = arith.constant 0 : index
    %c3_23 = arith.constant 3 : index
    %c0_24 = arith.constant 0 : index
    %30 = vector.load %arg7[%c0_22, %c3_23, %c0_24] : memref<8x4x128xf32, #tpu.memory_space<vmem>>, vector<1x1x128xf32>
    %31 = vector.shape_cast %30 : vector<1x1x128xf32> to vector<1x128xf32>
    %32 = vector.shape_cast %29 : vector<1x128xf32> to vector<1x1x128xf32>
    tpu.vector_store %arg7[%c0_22, %c3_23, %c0_24], %32 {strides = array<i32>} : memref<8x4x128xf32, #tpu.memory_space<vmem>>, vector<1x1x128xf32>,
    %c1_25 = arith.constant 1 : index
    %c0_26 = arith.constant 0 : index
    %33 = memref.load %arg0[%c1_25, %c0_26] : memref<8x4xf32, #tpu.memory_space<smem>>
    %34 = vector.broadcast %33 : f32 to vector<1x128xf32>
    %35 = arith.mulf %34, %0 : vector<1x128xf32>
    %36 = arith.addf %35, %1 : vector<1x128xf32>
    %c1_27 = arith.constant 1 : index
    %c0_28 = arith.constant 0 : index
    %c0_29 = arith.constant 0 : index
    %37 = vector.load %arg7[%c1_27, %c0_28, %c0_29] : memref<8x4x128xf32, #tpu.memory_space<vmem>>, vector<1x1x128xf32>
    %38 = vector.shape_cast %37 : vector<1x1x128xf32> to vector<1x128xf32>
    %39 = vector.shape_cast %36 : vector<1x128xf32> to vector<1x1x128xf32>
    tpu.vector_store %arg7[%c1_27, %c0_28, %c0_29], %39 {strides = array<i32>} : memref<8x4x128xf32, #tpu.memory_space<vmem>>, vector<1x1x128xf32>,
    %c1_30 = arith.constant 1 : index
    %c1_31 = arith.constant 1 : index
    %40 = memref.load %arg0[%c1_30, %c1_31] : memref<8x4xf32, #tpu.memory_space<smem>>
    %41 = vector.broadcast %40 : f32 to vector<1x128xf32>
    %42 = arith.mulf %41, %0 : vector<1x128xf32>
    %43 = arith.addf %42, %1 : vector<1x128xf32>
    %c1_32 = arith.constant 1 : index
    %c1_33 = arith.constant 1 : index
    %c0_34 = arith.constant 0 : index
    %44 = vector.load %arg7[%c1_32, %c1_33, %c0_34] : memref<8x4x128xf32, #tpu.memory_space<vmem>>, vector<1x1x128xf32>
    %45 = vector.shape_cast %44 : vector<1x1x128xf32> to vector<1x128xf32>
    %46 = vector.shape_cast %43 : vector<1x128xf32> to vector<1x1x128xf32>
    tpu.vector_store %arg7[%c1_32, %c1_33, %c0_34], %46 {strides = array<i32>} : memref<8x4x128xf32, #tpu.memory_space<vmem>>, vector<1x1x128xf32>,
    %c1_35 = arith.constant 1 : index
    %c2_36 = arith.constant 2 : index
    %47 = memref.load %arg0[%c1_35, %c2_36] : memref<8x4xf32, #tpu.memory_space<smem>>
    %48 = vector.broadcast %47 : f32 to vector<1x128xf32>
    %49 = arith.mulf %48, %0 : vector<1x128xf32>
    %50 = arith.addf %49, %1 : vector<1x128xf32>
    %c1_37 = arith.constant 1 : index
    %c2_38 = arith.constant 2 : index
    %c0_39 = arith.constant 0 : index
    %51 = vector.load %arg7[%c1_37, %c2_38, %c0_39] : memref<8x4x128xf32, #tpu.memory_space<vmem>>, vector<1x1x128xf32>
    %52 = vector.shape_cast %51 : vector<1x1x128xf32> to vector<1x128xf32>
    %53 = vector.shape_cast %50 : vector<1x128xf32> to vector<1x1x128xf32>
    tpu.vector_store %arg7[%c1_37, %c2_38, %c0_39], %53 {strides = array<i32>} : memref<8x4x128xf32, #tpu.memory_space<vmem>>, vector<1x1x128xf32>,
    %c1_40 = arith.constant 1 : index
    %c3_41 = arith.constant 3 : index
    %54 = memref.load %arg0[%c1_40, %c3_41] : memref<8x4xf32, #tpu.memory_space<smem>>
    %55 = vector.broadcast %54 : f32 to vector<1x128xf32>
    %56 = arith.mulf %55, %0 : vector<1x128xf32>
    %57 = arith.addf %56, %1 : vector<1x128xf32>
    %c1_42 = arith.constant 1 : index
    %c3_43 = arith.constant 3 : index
    %c0_44 = arith.constant 0 : index
    %58 = vector.load %arg7[%c1_42, %c3_43, %c0_44] : memref<8x4x128xf32, #tpu.memory_space<vmem>>, vector<1x1x128xf32>
    %59 = vector.shape_cast %58 : vector<1x1x128xf32> to vector<1x128xf32>
    %60 = vector.shape_cast %57 : vector<1x128xf32> to vector<1x1x128xf32>
    tpu.vector_store %arg7[%c1_42, %c3_43, %c0_44], %60 {strides = array<i32>} : memref<8x4x128xf32, #tpu.memory_space<vmem>>, vector<1x1x128xf32>,
    %c2_45 = arith.constant 2 : index
    %c0_46 = arith.constant 0 : index
    %61 = memref.load %arg0[%c2_45, %c0_46] : memref<8x4xf32, #tpu.memory_space<smem>>
    %62 = vector.broadcast %61 : f32 to vector<1x128xf32>
    %63 = arith.mulf %62, %0 : vector<1x128xf32>
    %64 = arith.addf %63, %1 : vector<1x128xf32>
    %c2_47 = arith.constant 2 : index
    %c0_48 = arith.constant 0 : index
    %c0_49 = arith.constant 0 : index
    %65 = vector.load %arg7[%c2_47, %c0_48, %c0_49] : memref<8x4x128xf32, #tpu.memory_space<vmem>>, vector<1x1x128xf32>
    %66 = vector.shape_cast %65 : vector<1x1x128xf32> to vector<1x128xf32>
    %67 = vector.shape_cast %64 : vector<1x128xf32> to vector<1x1x128xf32>
    tpu.vector_store %arg7[%c2_47, %c0_48, %c0_49], %67 {strides = array<i32>} : memref<8x4x128xf32, #tpu.memory_space<vmem>>, vector<1x1x128xf32>,
    %c2_50 = arith.constant 2 : index
    %c1_51 = arith.constant 1 : index
    %68 = memref.load %arg0[%c2_50, %c1_51] : memref<8x4xf32, #tpu.memory_space<smem>>
    %69 = vector.broadcast %68 : f32 to vector<1x128xf32>
    %70 = arith.mulf %69, %0 : vector<1x128xf32>
    %71 = arith.addf %70, %1 : vector<1x128xf32>
    %c2_52 = arith.constant 2 : index
    %c1_53 = arith.constant 1 : index
    %c0_54 = arith.constant 0 : index
    %72 = vector.load %arg7[%c2_52, %c1_53, %c0_54] : memref<8x4x128xf32, #tpu.memory_space<vmem>>, vector<1x1x128xf32>
    %73 = vector.shape_cast %72 : vector<1x1x128xf32> to vector<1x128xf32>
    %74 = vector.shape_cast %71 : vector<1x128xf32> to vector<1x1x128xf32>
    tpu.vector_store %arg7[%c2_52, %c1_53, %c0_54], %74 {strides = array<i32>} : memref<8x4x128xf32, #tpu.memory_space<vmem>>, vector<1x1x128xf32>,
    %c2_55 = arith.constant 2 : index
    %c2_56 = arith.constant 2 : index
    %75 = memref.load %arg0[%c2_55, %c2_56] : memref<8x4xf32, #tpu.memory_space<smem>>
    %76 = vector.broadcast %75 : f32 to vector<1x128xf32>
    %77 = arith.mulf %76, %0 : vector<1x128xf32>
    %78 = arith.addf %77, %1 : vector<1x128xf32>
    %c2_57 = arith.constant 2 : index
    %c2_58 = arith.constant 2 : index
    %c0_59 = arith.constant 0 : index
    %79 = vector.load %arg7[%c2_57, %c2_58, %c0_59] : memref<8x4x128xf32, #tpu.memory_space<vmem>>, vector<1x1x128xf32>
    %80 = vector.shape_cast %79 : vector<1x1x128xf32> to vector<1x128xf32>
    %81 = vector.shape_cast %78 : vector<1x128xf32> to vector<1x1x128xf32>
    tpu.vector_store %arg7[%c2_57, %c2_58, %c0_59], %81 {strides = array<i32>} : memref<8x4x128xf32, #tpu.memory_space<vmem>>, vector<1x1x128xf32>,
    %c2_60 = arith.constant 2 : index
    %c3_61 = arith.constant 3 : index
    %82 = memref.load %arg0[%c2_60, %c3_61] : memref<8x4xf32, #tpu.memory_space<smem>>
    %83 = vector.broadcast %82 : f32 to vector<1x128xf32>
    %84 = arith.mulf %83, %0 : vector<1x128xf32>
    %85 = arith.addf %84, %1 : vector<1x128xf32>
    %c2_62 = arith.constant 2 : index
    %c3_63 = arith.constant 3 : index
    %c0_64 = arith.constant 0 : index
    %86 = vector.load %arg7[%c2_62, %c3_63, %c0_64] : memref<8x4x128xf32, #tpu.memory_space<vmem>>, vector<1x1x128xf32>
    %87 = vector.shape_cast %86 : vector<1x1x128xf32> to vector<1x128xf32>
    %88 = vector.shape_cast %85 : vector<1x128xf32> to vector<1x1x128xf32>
    tpu.vector_store %arg7[%c2_62, %c3_63, %c0_64], %88 {strides = array<i32>} : memref<8x4x128xf32, #tpu.memory_space<vmem>>, vector<1x1x128xf32>,
    %c3_65 = arith.constant 3 : index
    %c0_66 = arith.constant 0 : index
    %89 = memref.load %arg0[%c3_65, %c0_66] : memref<8x4xf32, #tpu.memory_space<smem>>
    %90 = vector.broadcast %89 : f32 to vector<1x128xf32>
    %91 = arith.mulf %90, %0 : vector<1x128xf32>
    %92 = arith.addf %91, %1 : vector<1x128xf32>
    %c3_67 = arith.constant 3 : index
    %c0_68 = arith.constant 0 : index
    %c0_69 = arith.constant 0 : index
    %93 = vector.load %arg7[%c3_67, %c0_68, %c0_69] : memref<8x4x128xf32, #tpu.memory_space<vmem>>, vector<1x1x128xf32>
    %94 = vector.shape_cast %93 : vector<1x1x128xf32> to vector<1x128xf32>
    %95 = vector.shape_cast %92 : vector<1x128xf32> to vector<1x1x128xf32>
    tpu.vector_store %arg7[%c3_67, %c0_68, %c0_69], %95 {strides = array<i32>} : memref<8x4x128xf32, #tpu.memory_space<vmem>>, vector<1x1x128xf32>,
    %c3_70 = arith.constant 3 : index
    %c1_71 = arith.constant 1 : index
    %96 = memref.load %arg0[%c3_70, %c1_71] : memref<8x4xf32, #tpu.memory_space<smem>>
    %97 = vector.broadcast %96 : f32 to vector<1x128xf32>
    %98 = arith.mulf %97, %0 : vector<1x128xf32>
    %99 = arith.addf %98, %1 : vector<1x128xf32>
    %c3_72 = arith.constant 3 : index
    %c1_73 = arith.constant 1 : index
    %c0_74 = arith.constant 0 : index
    %100 = vector.load %arg7[%c3_72, %c1_73, %c0_74] : memref<8x4x128xf32, #tpu.memory_space<vmem>>, vector<1x1x128xf32>
    %101 = vector.shape_cast %100 : vector<1x1x128xf32> to vector<1x128xf32>
    %102 = vector.shape_cast %99 : vector<1x128xf32> to vector<1x1x128xf32>
    tpu.vector_store %arg7[%c3_72, %c1_73, %c0_74], %102 {strides = array<i32>} : memref<8x4x128xf32, #tpu.memory_space<vmem>>, vector<1x1x128xf32>,
    %c3_75 = arith.constant 3 : index
    %c2_76 = arith.constant 2 : index
    %103 = memref.load %arg0[%c3_75, %c2_76] : memref<8x4xf32, #tpu.memory_space<smem>>
    %104 = vector.broadcast %103 : f32 to vector<1x128xf32>
    %105 = arith.mulf %104, %0 : vector<1x128xf32>
    %106 = arith.addf %105, %1 : vector<1x128xf32>
    %c3_77 = arith.constant 3 : index
    %c2_78 = arith.constant 2 : index
    %c0_79 = arith.constant 0 : index
    %107 = vector.load %arg7[%c3_77, %c2_78, %c0_79] : memref<8x4x128xf32, #tpu.memory_space<vmem>>, vector<1x1x128xf32>
    %108 = vector.shape_cast %107 : vector<1x1x128xf32> to vector<1x128xf32>
    %109 = vector.shape_cast %106 : vector<1x128xf32> to vector<1x1x128xf32>
    tpu.vector_store %arg7[%c3_77, %c2_78, %c0_79], %109 {strides = array<i32>} : memref<8x4x128xf32, #tpu.memory_space<vmem>>, vector<1x1x128xf32>,
    %c3_80 = arith.constant 3 : index
    %c3_81 = arith.constant 3 : index
    %110 = memref.load %arg0[%c3_80, %c3_81] : memref<8x4xf32, #tpu.memory_space<smem>>
    %111 = vector.broadcast %110 : f32 to vector<1x128xf32>
    %112 = arith.mulf %111, %0 : vector<1x128xf32>
    %113 = arith.addf %112, %1 : vector<1x128xf32>
    %c3_82 = arith.constant 3 : index
    %c3_83 = arith.constant 3 : index
    %c0_84 = arith.constant 0 : index
    %114 = vector.load %arg7[%c3_82, %c3_83, %c0_84] : memref<8x4x128xf32, #tpu.memory_space<vmem>>, vector<1x1x128xf32>
    %115 = vector.shape_cast %114 : vector<1x1x128xf32> to vector<1x128xf32>
    %116 = vector.shape_cast %113 : vector<1x128xf32> to vector<1x1x128xf32>
    tpu.vector_store %arg7[%c3_82, %c3_83, %c0_84], %116 {strides = array<i32>} : memref<8x4x128xf32, #tpu.memory_space<vmem>>, vector<1x1x128xf32>,
    %c4 = arith.constant 4 : index
    %c0_85 = arith.constant 0 : index
    %117 = memref.load %arg0[%c4, %c0_85] : memref<8x4xf32, #tpu.memory_space<smem>>
    %118 = vector.broadcast %117 : f32 to vector<1x128xf32>
    %119 = arith.mulf %118, %0 : vector<1x128xf32>
    %120 = arith.addf %119, %1 : vector<1x128xf32>
    %c4_86 = arith.constant 4 : index
    %c0_87 = arith.constant 0 : index
    %c0_88 = arith.constant 0 : index
    %121 = vector.load %arg7[%c4_86, %c0_87, %c0_88] : memref<8x4x128xf32, #tpu.memory_space<vmem>>, vector<1x1x128xf32>
    %122 = vector.shape_cast %121 : vector<1x1x128xf32> to vector<1x128xf32>
    %123 = vector.shape_cast %120 : vector<1x128xf32> to vector<1x1x128xf32>
    tpu.vector_store %arg7[%c4_86, %c0_87, %c0_88], %123 {strides = array<i32>} : memref<8x4x128xf32, #tpu.memory_space<vmem>>, vector<1x1x128xf32>,
    %c4_89 = arith.constant 4 : index
    %c1_90 = arith.constant 1 : index
    %124 = memref.load %arg0[%c4_89, %c1_90] : memref<8x4xf32, #tpu.memory_space<smem>>
    %125 = vector.broadcast %124 : f32 to vector<1x128xf32>
    %126 = arith.mulf %125, %0 : vector<1x128xf32>
    %127 = arith.addf %126, %1 : vector<1x128xf32>
    %c4_91 = arith.constant 4 : index
    %c1_92 = arith.constant 1 : index
    %c0_93 = arith.constant 0 : index
    %128 = vector.load %arg7[%c4_91, %c1_92, %c0_93] : memref<8x4x128xf32, #tpu.memory_space<vmem>>, vector<1x1x128xf32>
    %129 = vector.shape_cast %128 : vector<1x1x128xf32> to vector<1x128xf32>
    %130 = vector.shape_cast %127 : vector<1x128xf32> to vector<1x1x128xf32>
    tpu.vector_store %arg7[%c4_91, %c1_92, %c0_93], %130 {strides = array<i32>} : memref<8x4x128xf32, #tpu.memory_space<vmem>>, vector<1x1x128xf32>,
    %c4_94 = arith.constant 4 : index
    %c2_95 = arith.constant 2 : index
    %131 = memref.load %arg0[%c4_94, %c2_95] : memref<8x4xf32, #tpu.memory_space<smem>>
    %132 = vector.broadcast %131 : f32 to vector<1x128xf32>
    %133 = arith.mulf %132, %0 : vector<1x128xf32>
    %134 = arith.addf %133, %1 : vector<1x128xf32>
    %c4_96 = arith.constant 4 : index
    %c2_97 = arith.constant 2 : index
    %c0_98 = arith.constant 0 : index
    %135 = vector.load %arg7[%c4_96, %c2_97, %c0_98] : memref<8x4x128xf32, #tpu.memory_space<vmem>>, vector<1x1x128xf32>
    %136 = vector.shape_cast %135 : vector<1x1x128xf32> to vector<1x128xf32>
    %137 = vector.shape_cast %134 : vector<1x128xf32> to vector<1x1x128xf32>
    tpu.vector_store %arg7[%c4_96, %c2_97, %c0_98], %137 {strides = array<i32>} : memref<8x4x128xf32, #tpu.memory_space<vmem>>, vector<1x1x128xf32>,
    %c4_99 = arith.constant 4 : index
    %c3_100 = arith.constant 3 : index
    %138 = memref.load %arg0[%c4_99, %c3_100] : memref<8x4xf32, #tpu.memory_space<smem>>
    %139 = vector.broadcast %138 : f32 to vector<1x128xf32>
    %140 = arith.mulf %139, %0 : vector<1x128xf32>
    %141 = arith.addf %140, %1 : vector<1x128xf32>
    %c4_101 = arith.constant 4 : index
    %c3_102 = arith.constant 3 : index
    %c0_103 = arith.constant 0 : index
    %142 = vector.load %arg7[%c4_101, %c3_102, %c0_103] : memref<8x4x128xf32, #tpu.memory_space<vmem>>, vector<1x1x128xf32>
    %143 = vector.shape_cast %142 : vector<1x1x128xf32> to vector<1x128xf32>
    %144 = vector.shape_cast %141 : vector<1x128xf32> to vector<1x1x128xf32>
    tpu.vector_store %arg7[%c4_101, %c3_102, %c0_103], %144 {strides = array<i32>} : memref<8x4x128xf32, #tpu.memory_space<vmem>>, vector<1x1x128xf32>,
    %c5 = arith.constant 5 : index
    %c0_104 = arith.constant 0 : index
    %145 = memref.load %arg0[%c5, %c0_104] : memref<8x4xf32, #tpu.memory_space<smem>>
    %146 = vector.broadcast %145 : f32 to vector<1x128xf32>
    %147 = arith.mulf %146, %0 : vector<1x128xf32>
    %148 = arith.addf %147, %1 : vector<1x128xf32>
    %c5_105 = arith.constant 5 : index
    %c0_106 = arith.constant 0 : index
    %c0_107 = arith.constant 0 : index
    %149 = vector.load %arg7[%c5_105, %c0_106, %c0_107] : memref<8x4x128xf32, #tpu.memory_space<vmem>>, vector<1x1x128xf32>
    %150 = vector.shape_cast %149 : vector<1x1x128xf32> to vector<1x128xf32>
    %151 = vector.shape_cast %148 : vector<1x128xf32> to vector<1x1x128xf32>
    tpu.vector_store %arg7[%c5_105, %c0_106, %c0_107], %151 {strides = array<i32>} : memref<8x4x128xf32, #tpu.memory_space<vmem>>, vector<1x1x128xf32>,
    %c5_108 = arith.constant 5 : index
    %c1_109 = arith.constant 1 : index
    %152 = memref.load %arg0[%c5_108, %c1_109] : memref<8x4xf32, #tpu.memory_space<smem>>
    %153 = vector.broadcast %152 : f32 to vector<1x128xf32>
    %154 = arith.mulf %153, %0 : vector<1x128xf32>
    %155 = arith.addf %154, %1 : vector<1x128xf32>
    %c5_110 = arith.constant 5 : index
    %c1_111 = arith.constant 1 : index
    %c0_112 = arith.constant 0 : index
    %156 = vector.load %arg7[%c5_110, %c1_111, %c0_112] : memref<8x4x128xf32, #tpu.memory_space<vmem>>, vector<1x1x128xf32>
    %157 = vector.shape_cast %156 : vector<1x1x128xf32> to vector<1x128xf32>
    %158 = vector.shape_cast %155 : vector<1x128xf32> to vector<1x1x128xf32>
    tpu.vector_store %arg7[%c5_110, %c1_111, %c0_112], %158 {strides = array<i32>} : memref<8x4x128xf32, #tpu.memory_space<vmem>>, vector<1x1x128xf32>,
    %c5_113 = arith.constant 5 : index
    %c2_114 = arith.constant 2 : index
    %159 = memref.load %arg0[%c5_113, %c2_114] : memref<8x4xf32, #tpu.memory_space<smem>>
    %160 = vector.broadcast %159 : f32 to vector<1x128xf32>
    %161 = arith.mulf %160, %0 : vector<1x128xf32>
    %162 = arith.addf %161, %1 : vector<1x128xf32>
    %c5_115 = arith.constant 5 : index
    %c2_116 = arith.constant 2 : index
    %c0_117 = arith.constant 0 : index
    %163 = vector.load %arg7[%c5_115, %c2_116, %c0_117] : memref<8x4x128xf32, #tpu.memory_space<vmem>>, vector<1x1x128xf32>
    %164 = vector.shape_cast %163 : vector<1x1x128xf32> to vector<1x128xf32>
    %165 = vector.shape_cast %162 : vector<1x128xf32> to vector<1x1x128xf32>
    tpu.vector_store %arg7[%c5_115, %c2_116, %c0_117], %165 {strides = array<i32>} : memref<8x4x128xf32, #tpu.memory_space<vmem>>, vector<1x1x128xf32>,
    %c5_118 = arith.constant 5 : index
    %c3_119 = arith.constant 3 : index
    %166 = memref.load %arg0[%c5_118, %c3_119] : memref<8x4xf32, #tpu.memory_space<smem>>
    %167 = vector.broadcast %166 : f32 to vector<1x128xf32>
    %168 = arith.mulf %167, %0 : vector<1x128xf32>
    %169 = arith.addf %168, %1 : vector<1x128xf32>
    %c5_120 = arith.constant 5 : index
    %c3_121 = arith.constant 3 : index
    %c0_122 = arith.constant 0 : index
    %170 = vector.load %arg7[%c5_120, %c3_121, %c0_122] : memref<8x4x128xf32, #tpu.memory_space<vmem>>, vector<1x1x128xf32>
    %171 = vector.shape_cast %170 : vector<1x1x128xf32> to vector<1x128xf32>
    %172 = vector.shape_cast %169 : vector<1x128xf32> to vector<1x1x128xf32>
    tpu.vector_store %arg7[%c5_120, %c3_121, %c0_122], %172 {strides = array<i32>} : memref<8x4x128xf32, #tpu.memory_space<vmem>>, vector<1x1x128xf32>,
    %c6 = arith.constant 6 : index
    %c0_123 = arith.constant 0 : index
    %173 = memref.load %arg0[%c6, %c0_123] : memref<8x4xf32, #tpu.memory_space<smem>>
    %174 = vector.broadcast %173 : f32 to vector<1x128xf32>
    %175 = arith.mulf %174, %0 : vector<1x128xf32>
    %176 = arith.addf %175, %1 : vector<1x128xf32>
    %c6_124 = arith.constant 6 : index
    %c0_125 = arith.constant 0 : index
    %c0_126 = arith.constant 0 : index
    %177 = vector.load %arg7[%c6_124, %c0_125, %c0_126] : memref<8x4x128xf32, #tpu.memory_space<vmem>>, vector<1x1x128xf32>
    %178 = vector.shape_cast %177 : vector<1x1x128xf32> to vector<1x128xf32>
    %179 = vector.shape_cast %176 : vector<1x128xf32> to vector<1x1x128xf32>
    tpu.vector_store %arg7[%c6_124, %c0_125, %c0_126], %179 {strides = array<i32>} : memref<8x4x128xf32, #tpu.memory_space<vmem>>, vector<1x1x128xf32>,
    %c6_127 = arith.constant 6 : index
    %c1_128 = arith.constant 1 : index
    %180 = memref.load %arg0[%c6_127, %c1_128] : memref<8x4xf32, #tpu.memory_space<smem>>
    %181 = vector.broadcast %180 : f32 to vector<1x128xf32>
    %182 = arith.mulf %181, %0 : vector<1x128xf32>
    %183 = arith.addf %182, %1 : vector<1x128xf32>
    %c6_129 = arith.constant 6 : index
    %c1_130 = arith.constant 1 : index
    %c0_131 = arith.constant 0 : index
    %184 = vector.load %arg7[%c6_129, %c1_130, %c0_131] : memref<8x4x128xf32, #tpu.memory_space<vmem>>, vector<1x1x128xf32>
    %185 = vector.shape_cast %184 : vector<1x1x128xf32> to vector<1x128xf32>
    %186 = vector.shape_cast %183 : vector<1x128xf32> to vector<1x1x128xf32>
    tpu.vector_store %arg7[%c6_129, %c1_130, %c0_131], %186 {strides = array<i32>} : memref<8x4x128xf32, #tpu.memory_space<vmem>>, vector<1x1x128xf32>,
    %c6_132 = arith.constant 6 : index
    %c2_133 = arith.constant 2 : index
    %187 = memref.load %arg0[%c6_132, %c2_133] : memref<8x4xf32, #tpu.memory_space<smem>>
    %188 = vector.broadcast %187 : f32 to vector<1x128xf32>
    %189 = arith.mulf %188, %0 : vector<1x128xf32>
    %190 = arith.addf %189, %1 : vector<1x128xf32>
    %c6_134 = arith.constant 6 : index
    %c2_135 = arith.constant 2 : index
    %c0_136 = arith.constant 0 : index
    %191 = vector.load %arg7[%c6_134, %c2_135, %c0_136] : memref<8x4x128xf32, #tpu.memory_space<vmem>>, vector<1x1x128xf32>
    %192 = vector.shape_cast %191 : vector<1x1x128xf32> to vector<1x128xf32>
    %193 = vector.shape_cast %190 : vector<1x128xf32> to vector<1x1x128xf32>
    tpu.vector_store %arg7[%c6_134, %c2_135, %c0_136], %193 {strides = array<i32>} : memref<8x4x128xf32, #tpu.memory_space<vmem>>, vector<1x1x128xf32>,
    %c6_137 = arith.constant 6 : index
    %c3_138 = arith.constant 3 : index
    %194 = memref.load %arg0[%c6_137, %c3_138] : memref<8x4xf32, #tpu.memory_space<smem>>
    %195 = vector.broadcast %194 : f32 to vector<1x128xf32>
    %196 = arith.mulf %195, %0 : vector<1x128xf32>
    %197 = arith.addf %196, %1 : vector<1x128xf32>
    %c6_139 = arith.constant 6 : index
    %c3_140 = arith.constant 3 : index
    %c0_141 = arith.constant 0 : index
    %198 = vector.load %arg7[%c6_139, %c3_140, %c0_141] : memref<8x4x128xf32, #tpu.memory_space<vmem>>, vector<1x1x128xf32>
    %199 = vector.shape_cast %198 : vector<1x1x128xf32> to vector<1x128xf32>
    %200 = vector.shape_cast %197 : vector<1x128xf32> to vector<1x1x128xf32>
    tpu.vector_store %arg7[%c6_139, %c3_140, %c0_141], %200 {strides = array<i32>} : memref<8x4x128xf32, #tpu.memory_space<vmem>>, vector<1x1x128xf32>,
    %c7 = arith.constant 7 : index
    %c0_142 = arith.constant 0 : index
    %201 = memref.load %arg0[%c7, %c0_142] : memref<8x4xf32, #tpu.memory_space<smem>>
    %202 = vector.broadcast %201 : f32 to vector<1x128xf32>
    %203 = arith.mulf %202, %0 : vector<1x128xf32>
    %204 = arith.addf %203, %1 : vector<1x128xf32>
    %c7_143 = arith.constant 7 : index
    %c0_144 = arith.constant 0 : index
    %c0_145 = arith.constant 0 : index
    %205 = vector.load %arg7[%c7_143, %c0_144, %c0_145] : memref<8x4x128xf32, #tpu.memory_space<vmem>>, vector<1x1x128xf32>
    %206 = vector.shape_cast %205 : vector<1x1x128xf32> to vector<1x128xf32>
    %207 = vector.shape_cast %204 : vector<1x128xf32> to vector<1x1x128xf32>
    tpu.vector_store %arg7[%c7_143, %c0_144, %c0_145], %207 {strides = array<i32>} : memref<8x4x128xf32, #tpu.memory_space<vmem>>, vector<1x1x128xf32>,
    %c7_146 = arith.constant 7 : index
    %c1_147 = arith.constant 1 : index
    %208 = memref.load %arg0[%c7_146, %c1_147] : memref<8x4xf32, #tpu.memory_space<smem>>
    %209 = vector.broadcast %208 : f32 to vector<1x128xf32>
    %210 = arith.mulf %209, %0 : vector<1x128xf32>
    %211 = arith.addf %210, %1 : vector<1x128xf32>
    %c7_148 = arith.constant 7 : index
    %c1_149 = arith.constant 1 : index
    %c0_150 = arith.constant 0 : index
    %212 = vector.load %arg7[%c7_148, %c1_149, %c0_150] : memref<8x4x128xf32, #tpu.memory_space<vmem>>, vector<1x1x128xf32>
    %213 = vector.shape_cast %212 : vector<1x1x128xf32> to vector<1x128xf32>
    %214 = vector.shape_cast %211 : vector<1x128xf32> to vector<1x1x128xf32>
    tpu.vector_store %arg7[%c7_148, %c1_149, %c0_150], %214 {strides = array<i32>} : memref<8x4x128xf32, #tpu.memory_space<vmem>>, vector<1x1x128xf32>,
    %c7_151 = arith.constant 7 : index
    %c2_152 = arith.constant 2 : index
    %215 = memref.load %arg0[%c7_151, %c2_152] : memref<8x4xf32, #tpu.memory_space<smem>>
    %216 = vector.broadcast %215 : f32 to vector<1x128xf32>
    %217 = arith.mulf %216, %0 : vector<1x128xf32>
    %218 = arith.addf %217, %1 : vector<1x128xf32>
    %c7_153 = arith.constant 7 : index
    %c2_154 = arith.constant 2 : index
    %c0_155 = arith.constant 0 : index
    %219 = vector.load %arg7[%c7_153, %c2_154, %c0_155] : memref<8x4x128xf32, #tpu.memory_space<vmem>>, vector<1x1x128xf32>
    %220 = vector.shape_cast %219 : vector<1x1x128xf32> to vector<1x128xf32>
    %221 = vector.shape_cast %218 : vector<1x128xf32> to vector<1x1x128xf32>
    tpu.vector_store %arg7[%c7_153, %c2_154, %c0_155], %221 {strides = array<i32>} : memref<8x4x128xf32, #tpu.memory_space<vmem>>, vector<1x1x128xf32>,
    %c7_156 = arith.constant 7 : index
    %c3_157 = arith.constant 3 : index
    %222 = memref.load %arg0[%c7_156, %c3_157] : memref<8x4xf32, #tpu.memory_space<smem>>
    %223 = vector.broadcast %222 : f32 to vector<1x128xf32>
    %224 = arith.mulf %223, %0 : vector<1x128xf32>
    %225 = arith.addf %224, %1 : vector<1x128xf32>
    %c7_158 = arith.constant 7 : index
    %c3_159 = arith.constant 3 : index
    %c0_160 = arith.constant 0 : index
    %226 = vector.load %arg7[%c7_158, %c3_159, %c0_160] : memref<8x4x128xf32, #tpu.memory_space<vmem>>, vector<1x1x128xf32>
    %227 = vector.shape_cast %226 : vector<1x1x128xf32> to vector<1x128xf32>
    %228 = vector.shape_cast %225 : vector<1x128xf32> to vector<1x1x128xf32>
    tpu.vector_store %arg7[%c7_158, %c3_159, %c0_160], %228 {strides = array<i32>} : memref<8x4x128xf32, #tpu.memory_space<vmem>>, vector<1x1x128xf32>,
    %cst = arith.constant 0.000000e+00 : f32
    %229 = vector.broadcast %cst : f32 to vector<4x32xf32>
    %c0_i32 = arith.constant 0 : i32
    %cst_161 = arith.constant dense<0.000000e+00> : vector<4x128xf32>
    %230 = tpu.matmul %229, %2, %cst_161 {dimension_numbers = #tpu.dot_dimension_numbers<[1], [0], [0], [1], [0, 0, 1, 1], [], []>} : vector<4x32xf32>, vector<32x128xf32>, vector<4x128xf32> -> vector<4x128xf32>
    %231 = arith.index_cast %c0_i32 : i32 to index
    %c0_162 = arith.constant 0 : index
    %c0_163 = arith.constant 0 : index
    %232 = vector.load %arg7[%231, %c0_162, %c0_163] : memref<8x4x128xf32, #tpu.memory_space<vmem>>, vector<1x4x128xf32>
    %233 = vector.shape_cast %232 : vector<1x4x128xf32> to vector<4x128xf32>
    %234 = arith.addf %230, %233 : vector<4x128xf32>
    %235 = vector.extract_strided_slice %234 {offsets = [0, 0], sizes = [4, 96], strides = [1, 1]} : vector<4x128xf32> to vector<4x96xf32>
    %236 = arith.negf %235 : vector<4x96xf32>
    %237 = math.exp %236 : vector<4x96xf32>
    %cst_164 = arith.constant 1.000000e+00 : f32
    %238 = vector.broadcast %cst_164 : f32 to vector<4x96xf32>
    %239 = arith.addf %238, %237 : vector<4x96xf32>
    %240 = arith.divf %238, %239 : vector<4x96xf32>
    %241 = vector.extract_strided_slice %234 {offsets = [0, 96], sizes = [4, 32], strides = [1, 1]} : vector<4x128xf32> to vector<4x32xf32>
    %242 = math.tanh %241 : vector<4x32xf32>
    %243 = vector.extract_strided_slice %240 {offsets = [0, 0], sizes = [4, 32], strides = [1, 1]} : vector<4x96xf32> to vector<4x32xf32>
    %244 = vector.extract_strided_slice %240 {offsets = [0, 32], sizes = [4, 32], strides = [1, 1]} : vector<4x96xf32> to vector<4x32xf32>
    %245 = vector.extract_strided_slice %240 {offsets = [0, 64], sizes = [4, 32], strides = [1, 1]} : vector<4x96xf32> to vector<4x32xf32>
    %246 = arith.mulf %244, %229 : vector<4x32xf32>
    %247 = arith.mulf %243, %242 : vector<4x32xf32>
    %248 = arith.addf %246, %247 : vector<4x32xf32>
    %249 = math.tanh %248 : vector<4x32xf32>
    %250 = arith.mulf %245, %249 : vector<4x32xf32>
    %251 = arith.index_cast %c0_i32 : i32 to index
    %c0_165 = arith.constant 0 : index
    %c0_166 = arith.constant 0 : index
    %252 = vector.load %arg8[%251, %c0_165, %c0_166] : memref<8x4x32xf32, #tpu.memory_space<vmem>>, vector<1x4x32xf32>
    %253 = vector.shape_cast %252 : vector<1x4x32xf32> to vector<4x32xf32>
    %254 = vector.shape_cast %250 : vector<4x32xf32> to vector<1x4x32xf32>
    tpu.vector_store %arg8[%251, %c0_165, %c0_166], %254 {strides = array<i32>} : memref<8x4x32xf32, #tpu.memory_space<vmem>>, vector<1x4x32xf32>,
    %c1_i32 = arith.constant 1 : i32
    %cst_167 = arith.constant dense<0.000000e+00> : vector<4x128xf32>
    %255 = tpu.matmul %250, %2, %cst_167 {dimension_numbers = #tpu.dot_dimension_numbers<[1], [0], [0], [1], [0, 0, 1, 1], [], []>} : vector<4x32xf32>, vector<32x128xf32>, vector<4x128xf32> -> vector<4x128xf32>
    %256 = arith.index_cast %c1_i32 : i32 to index
    %c0_168 = arith.constant 0 : index
    %c0_169 = arith.constant 0 : index
    %257 = vector.load %arg7[%256, %c0_168, %c0_169] : memref<8x4x128xf32, #tpu.memory_space<vmem>>, vector<1x4x128xf32>
    %258 = vector.shape_cast %257 : vector<1x4x128xf32> to vector<4x128xf32>
    %259 = arith.addf %255, %258 : vector<4x128xf32>
    %260 = vector.extract_strided_slice %259 {offsets = [0, 0], sizes = [4, 96], strides = [1, 1]} : vector<4x128xf32> to vector<4x96xf32>
    %261 = arith.negf %260 : vector<4x96xf32>
    %262 = math.exp %261 : vector<4x96xf32>
    %cst_170 = arith.constant 1.000000e+00 : f32
    %263 = vector.broadcast %cst_170 : f32 to vector<4x96xf32>
    %264 = arith.addf %263, %262 : vector<4x96xf32>
    %265 = arith.divf %263, %264 : vector<4x96xf32>
    %266 = vector.extract_strided_slice %259 {offsets = [0, 96], sizes = [4, 32], strides = [1, 1]} : vector<4x128xf32> to vector<4x32xf32>
    %267 = math.tanh %266 : vector<4x32xf32>
    %268 = vector.extract_strided_slice %265 {offsets = [0, 0], sizes = [4, 32], strides = [1, 1]} : vector<4x96xf32> to vector<4x32xf32>
    %269 = vector.extract_strided_slice %265 {offsets = [0, 32], sizes = [4, 32], strides = [1, 1]} : vector<4x96xf32> to vector<4x32xf32>
    %270 = vector.extract_strided_slice %265 {offsets = [0, 64], sizes = [4, 32], strides = [1, 1]} : vector<4x96xf32> to vector<4x32xf32>
    %271 = arith.mulf %269, %248 : vector<4x32xf32>
    %272 = arith.mulf %268, %267 : vector<4x32xf32>
    %273 = arith.addf %271, %272 : vector<4x32xf32>
    %274 = math.tanh %273 : vector<4x32xf32>
    %275 = arith.mulf %270, %274 : vector<4x32xf32>
    %276 = arith.index_cast %c1_i32 : i32 to index
    %c0_171 = arith.constant 0 : index
    %c0_172 = arith.constant 0 : index
    %277 = vector.load %arg8[%276, %c0_171, %c0_172] : memref<8x4x32xf32, #tpu.memory_space<vmem>>, vector<1x4x32xf32>
    %278 = vector.shape_cast %277 : vector<1x4x32xf32> to vector<4x32xf32>
    %279 = vector.shape_cast %275 : vector<4x32xf32> to vector<1x4x32xf32>
    tpu.vector_store %arg8[%276, %c0_171, %c0_172], %279 {strides = array<i32>} : memref<8x4x32xf32, #tpu.memory_space<vmem>>, vector<1x4x32xf32>,
    %c2_i32 = arith.constant 2 : i32
    %cst_173 = arith.constant dense<0.000000e+00> : vector<4x128xf32>
    %280 = tpu.matmul %275, %2, %cst_173 {dimension_numbers = #tpu.dot_dimension_numbers<[1], [0], [0], [1], [0, 0, 1, 1], [], []>} : vector<4x32xf32>, vector<32x128xf32>, vector<4x128xf32> -> vector<4x128xf32>
    %281 = arith.index_cast %c2_i32 : i32 to index
    %c0_174 = arith.constant 0 : index
    %c0_175 = arith.constant 0 : index
    %282 = vector.load %arg7[%281, %c0_174, %c0_175] : memref<8x4x128xf32, #tpu.memory_space<vmem>>, vector<1x4x128xf32>
    %283 = vector.shape_cast %282 : vector<1x4x128xf32> to vector<4x128xf32>
    %284 = arith.addf %280, %283 : vector<4x128xf32>
    %285 = vector.extract_strided_slice %284 {offsets = [0, 0], sizes = [4, 96], strides = [1, 1]} : vector<4x128xf32> to vector<4x96xf32>
    %286 = arith.negf %285 : vector<4x96xf32>
    %287 = math.exp %286 : vector<4x96xf32>
    %cst_176 = arith.constant 1.000000e+00 : f32
    %288 = vector.broadcast %cst_176 : f32 to vector<4x96xf32>
    %289 = arith.addf %288, %287 : vector<4x96xf32>
    %290 = arith.divf %288, %289 : vector<4x96xf32>
    %291 = vector.extract_strided_slice %284 {offsets = [0, 96], sizes = [4, 32], strides = [1, 1]} : vector<4x128xf32> to vector<4x32xf32>
    %292 = math.tanh %291 : vector<4x32xf32>
    %293 = vector.extract_strided_slice %290 {offsets = [0, 0], sizes = [4, 32], strides = [1, 1]} : vector<4x96xf32> to vector<4x32xf32>
    %294 = vector.extract_strided_slice %290 {offsets = [0, 32], sizes = [4, 32], strides = [1, 1]} : vector<4x96xf32> to vector<4x32xf32>
    %295 = vector.extract_strided_slice %290 {offsets = [0, 64], sizes = [4, 32], strides = [1, 1]} : vector<4x96xf32> to vector<4x32xf32>
    %296 = arith.mulf %294, %273 : vector<4x32xf32>
    %297 = arith.mulf %293, %292 : vector<4x32xf32>
    %298 = arith.addf %296, %297 : vector<4x32xf32>
    %299 = math.tanh %298 : vector<4x32xf32>
    %300 = arith.mulf %295, %299 : vector<4x32xf32>
    %301 = arith.index_cast %c2_i32 : i32 to index
    %c0_177 = arith.constant 0 : index
    %c0_178 = arith.constant 0 : index
    %302 = vector.load %arg8[%301, %c0_177, %c0_178] : memref<8x4x32xf32, #tpu.memory_space<vmem>>, vector<1x4x32xf32>
    %303 = vector.shape_cast %302 : vector<1x4x32xf32> to vector<4x32xf32>
    %304 = vector.shape_cast %300 : vector<4x32xf32> to vector<1x4x32xf32>
    tpu.vector_store %arg8[%301, %c0_177, %c0_178], %304 {strides = array<i32>} : memref<8x4x32xf32, #tpu.memory_space<vmem>>, vector<1x4x32xf32>,
    %c3_i32 = arith.constant 3 : i32
    %cst_179 = arith.constant dense<0.000000e+00> : vector<4x128xf32>
    %305 = tpu.matmul %300, %2, %cst_179 {dimension_numbers = #tpu.dot_dimension_numbers<[1], [0], [0], [1], [0, 0, 1, 1], [], []>} : vector<4x32xf32>, vector<32x128xf32>, vector<4x128xf32> -> vector<4x128xf32>
    %306 = arith.index_cast %c3_i32 : i32 to index
    %c0_180 = arith.constant 0 : index
    %c0_181 = arith.constant 0 : index
    %307 = vector.load %arg7[%306, %c0_180, %c0_181] : memref<8x4x128xf32, #tpu.memory_space<vmem>>, vector<1x4x128xf32>
    %308 = vector.shape_cast %307 : vector<1x4x128xf32> to vector<4x128xf32>
    %309 = arith.addf %305, %308 : vector<4x128xf32>
    %310 = vector.extract_strided_slice %309 {offsets = [0, 0], sizes = [4, 96], strides = [1, 1]} : vector<4x128xf32> to vector<4x96xf32>
    %311 = arith.negf %310 : vector<4x96xf32>
    %312 = math.exp %311 : vector<4x96xf32>
    %cst_182 = arith.constant 1.000000e+00 : f32
    %313 = vector.broadcast %cst_182 : f32 to vector<4x96xf32>
    %314 = arith.addf %313, %312 : vector<4x96xf32>
    %315 = arith.divf %313, %314 : vector<4x96xf32>
    %316 = vector.extract_strided_slice %309 {offsets = [0, 96], sizes = [4, 32], strides = [1, 1]} : vector<4x128xf32> to vector<4x32xf32>
    %317 = math.tanh %316 : vector<4x32xf32>
    %318 = vector.extract_strided_slice %315 {offsets = [0, 0], sizes = [4, 32], strides = [1, 1]} : vector<4x96xf32> to vector<4x32xf32>
    %319 = vector.extract_strided_slice %315 {offsets = [0, 32], sizes = [4, 32], strides = [1, 1]} : vector<4x96xf32> to vector<4x32xf32>
    %320 = vector.extract_strided_slice %315 {offsets = [0, 64], sizes = [4, 32], strides = [1, 1]} : vector<4x96xf32> to vector<4x32xf32>
    %321 = arith.mulf %319, %298 : vector<4x32xf32>
    %322 = arith.mulf %318, %317 : vector<4x32xf32>
    %323 = arith.addf %321, %322 : vector<4x32xf32>
    %324 = math.tanh %323 : vector<4x32xf32>
    %325 = arith.mulf %320, %324 : vector<4x32xf32>
    %326 = arith.index_cast %c3_i32 : i32 to index
    %c0_183 = arith.constant 0 : index
    %c0_184 = arith.constant 0 : index
    %327 = vector.load %arg8[%326, %c0_183, %c0_184] : memref<8x4x32xf32, #tpu.memory_space<vmem>>, vector<1x4x32xf32>
    %328 = vector.shape_cast %327 : vector<1x4x32xf32> to vector<4x32xf32>
    %329 = vector.shape_cast %325 : vector<4x32xf32> to vector<1x4x32xf32>
    tpu.vector_store %arg8[%326, %c0_183, %c0_184], %329 {strides = array<i32>} : memref<8x4x32xf32, #tpu.memory_space<vmem>>, vector<1x4x32xf32>,
    %c4_i32 = arith.constant 4 : i32
    %cst_185 = arith.constant dense<0.000000e+00> : vector<4x128xf32>
    %330 = tpu.matmul %325, %2, %cst_185 {dimension_numbers = #tpu.dot_dimension_numbers<[1], [0], [0], [1], [0, 0, 1, 1], [], []>} : vector<4x32xf32>, vector<32x128xf32>, vector<4x128xf32> -> vector<4x128xf32>
    %331 = arith.index_cast %c4_i32 : i32 to index
    %c0_186 = arith.constant 0 : index
    %c0_187 = arith.constant 0 : index
    %332 = vector.load %arg7[%331, %c0_186, %c0_187] : memref<8x4x128xf32, #tpu.memory_space<vmem>>, vector<1x4x128xf32>
    %333 = vector.shape_cast %332 : vector<1x4x128xf32> to vector<4x128xf32>
    %334 = arith.addf %330, %333 : vector<4x128xf32>
    %335 = vector.extract_strided_slice %334 {offsets = [0, 0], sizes = [4, 96], strides = [1, 1]} : vector<4x128xf32> to vector<4x96xf32>
    %336 = arith.negf %335 : vector<4x96xf32>
    %337 = math.exp %336 : vector<4x96xf32>
    %cst_188 = arith.constant 1.000000e+00 : f32
    %338 = vector.broadcast %cst_188 : f32 to vector<4x96xf32>
    %339 = arith.addf %338, %337 : vector<4x96xf32>
    %340 = arith.divf %338, %339 : vector<4x96xf32>
    %341 = vector.extract_strided_slice %334 {offsets = [0, 96], sizes = [4, 32], strides = [1, 1]} : vector<4x128xf32> to vector<4x32xf32>
    %342 = math.tanh %341 : vector<4x32xf32>
    %343 = vector.extract_strided_slice %340 {offsets = [0, 0], sizes = [4, 32], strides = [1, 1]} : vector<4x96xf32> to vector<4x32xf32>
    %344 = vector.extract_strided_slice %340 {offsets = [0, 32], sizes = [4, 32], strides = [1, 1]} : vector<4x96xf32> to vector<4x32xf32>
    %345 = vector.extract_strided_slice %340 {offsets = [0, 64], sizes = [4, 32], strides = [1, 1]} : vector<4x96xf32> to vector<4x32xf32>
    %346 = arith.mulf %344, %323 : vector<4x32xf32>
    %347 = arith.mulf %343, %342 : vector<4x32xf32>
    %348 = arith.addf %346, %347 : vector<4x32xf32>
    %349 = math.tanh %348 : vector<4x32xf32>
    %350 = arith.mulf %345, %349 : vector<4x32xf32>
    %351 = arith.index_cast %c4_i32 : i32 to index
    %c0_189 = arith.constant 0 : index
    %c0_190 = arith.constant 0 : index
    %352 = vector.load %arg8[%351, %c0_189, %c0_190] : memref<8x4x32xf32, #tpu.memory_space<vmem>>, vector<1x4x32xf32>
    %353 = vector.shape_cast %352 : vector<1x4x32xf32> to vector<4x32xf32>
    %354 = vector.shape_cast %350 : vector<4x32xf32> to vector<1x4x32xf32>
    tpu.vector_store %arg8[%351, %c0_189, %c0_190], %354 {strides = array<i32>} : memref<8x4x32xf32, #tpu.memory_space<vmem>>, vector<1x4x32xf32>,
    %c5_i32 = arith.constant 5 : i32
    %cst_191 = arith.constant dense<0.000000e+00> : vector<4x128xf32>
    %355 = tpu.matmul %350, %2, %cst_191 {dimension_numbers = #tpu.dot_dimension_numbers<[1], [0], [0], [1], [0, 0, 1, 1], [], []>} : vector<4x32xf32>, vector<32x128xf32>, vector<4x128xf32> -> vector<4x128xf32>
    %356 = arith.index_cast %c5_i32 : i32 to index
    %c0_192 = arith.constant 0 : index
    %c0_193 = arith.constant 0 : index
    %357 = vector.load %arg7[%356, %c0_192, %c0_193] : memref<8x4x128xf32, #tpu.memory_space<vmem>>, vector<1x4x128xf32>
    %358 = vector.shape_cast %357 : vector<1x4x128xf32> to vector<4x128xf32>
    %359 = arith.addf %355, %358 : vector<4x128xf32>
    %360 = vector.extract_strided_slice %359 {offsets = [0, 0], sizes = [4, 96], strides = [1, 1]} : vector<4x128xf32> to vector<4x96xf32>
    %361 = arith.negf %360 : vector<4x96xf32>
    %362 = math.exp %361 : vector<4x96xf32>
    %cst_194 = arith.constant 1.000000e+00 : f32
    %363 = vector.broadcast %cst_194 : f32 to vector<4x96xf32>
    %364 = arith.addf %363, %362 : vector<4x96xf32>
    %365 = arith.divf %363, %364 : vector<4x96xf32>
    %366 = vector.extract_strided_slice %359 {offsets = [0, 96], sizes = [4, 32], strides = [1, 1]} : vector<4x128xf32> to vector<4x32xf32>
    %367 = math.tanh %366 : vector<4x32xf32>
    %368 = vector.extract_strided_slice %365 {offsets = [0, 0], sizes = [4, 32], strides = [1, 1]} : vector<4x96xf32> to vector<4x32xf32>
    %369 = vector.extract_strided_slice %365 {offsets = [0, 32], sizes = [4, 32], strides = [1, 1]} : vector<4x96xf32> to vector<4x32xf32>
    %370 = vector.extract_strided_slice %365 {offsets = [0, 64], sizes = [4, 32], strides = [1, 1]} : vector<4x96xf32> to vector<4x32xf32>
    %371 = arith.mulf %369, %348 : vector<4x32xf32>
    %372 = arith.mulf %368, %367 : vector<4x32xf32>
    %373 = arith.addf %371, %372 : vector<4x32xf32>
    %374 = math.tanh %373 : vector<4x32xf32>
    %375 = arith.mulf %370, %374 : vector<4x32xf32>
    %376 = arith.index_cast %c5_i32 : i32 to index
    %c0_195 = arith.constant 0 : index
    %c0_196 = arith.constant 0 : index
    %377 = vector.load %arg8[%376, %c0_195, %c0_196] : memref<8x4x32xf32, #tpu.memory_space<vmem>>, vector<1x4x32xf32>
    %378 = vector.shape_cast %377 : vector<1x4x32xf32> to vector<4x32xf32>
    %379 = vector.shape_cast %375 : vector<4x32xf32> to vector<1x4x32xf32>
    tpu.vector_store %arg8[%376, %c0_195, %c0_196], %379 {strides = array<i32>} : memref<8x4x32xf32, #tpu.memory_space<vmem>>, vector<1x4x32xf32>,
    %c6_i32 = arith.constant 6 : i32
    %cst_197 = arith.constant dense<0.000000e+00> : vector<4x128xf32>
    %380 = tpu.matmul %375, %2, %cst_197 {dimension_numbers = #tpu.dot_dimension_numbers<[1], [0], [0], [1], [0, 0, 1, 1], [], []>} : vector<4x32xf32>, vector<32x128xf32>, vector<4x128xf32> -> vector<4x128xf32>
    %381 = arith.index_cast %c6_i32 : i32 to index
    %c0_198 = arith.constant 0 : index
    %c0_199 = arith.constant 0 : index
    %382 = vector.load %arg7[%381, %c0_198, %c0_199] : memref<8x4x128xf32, #tpu.memory_space<vmem>>, vector<1x4x128xf32>
    %383 = vector.shape_cast %382 : vector<1x4x128xf32> to vector<4x128xf32>
    %384 = arith.addf %380, %383 : vector<4x128xf32>
    %385 = vector.extract_strided_slice %384 {offsets = [0, 0], sizes = [4, 96], strides = [1, 1]} : vector<4x128xf32> to vector<4x96xf32>
    %386 = arith.negf %385 : vector<4x96xf32>
    %387 = math.exp %386 : vector<4x96xf32>
    %cst_200 = arith.constant 1.000000e+00 : f32
    %388 = vector.broadcast %cst_200 : f32 to vector<4x96xf32>
    %389 = arith.addf %388, %387 : vector<4x96xf32>
    %390 = arith.divf %388, %389 : vector<4x96xf32>
    %391 = vector.extract_strided_slice %384 {offsets = [0, 96], sizes = [4, 32], strides = [1, 1]} : vector<4x128xf32> to vector<4x32xf32>
    %392 = math.tanh %391 : vector<4x32xf32>
    %393 = vector.extract_strided_slice %390 {offsets = [0, 0], sizes = [4, 32], strides = [1, 1]} : vector<4x96xf32> to vector<4x32xf32>
    %394 = vector.extract_strided_slice %390 {offsets = [0, 32], sizes = [4, 32], strides = [1, 1]} : vector<4x96xf32> to vector<4x32xf32>
    %395 = vector.extract_strided_slice %390 {offsets = [0, 64], sizes = [4, 32], strides = [1, 1]} : vector<4x96xf32> to vector<4x32xf32>
    %396 = arith.mulf %394, %373 : vector<4x32xf32>
    %397 = arith.mulf %393, %392 : vector<4x32xf32>
    %398 = arith.addf %396, %397 : vector<4x32xf32>
    %399 = math.tanh %398 : vector<4x32xf32>
    %400 = arith.mulf %395, %399 : vector<4x32xf32>
    %401 = arith.index_cast %c6_i32 : i32 to index
    %c0_201 = arith.constant 0 : index
    %c0_202 = arith.constant 0 : index
    %402 = vector.load %arg8[%401, %c0_201, %c0_202] : memref<8x4x32xf32, #tpu.memory_space<vmem>>, vector<1x4x32xf32>
    %403 = vector.shape_cast %402 : vector<1x4x32xf32> to vector<4x32xf32>
    %404 = vector.shape_cast %400 : vector<4x32xf32> to vector<1x4x32xf32>
    tpu.vector_store %arg8[%401, %c0_201, %c0_202], %404 {strides = array<i32>} : memref<8x4x32xf32, #tpu.memory_space<vmem>>, vector<1x4x32xf32>,
    %c7_i32 = arith.constant 7 : i32
    %cst_203 = arith.constant dense<0.000000e+00> : vector<4x128xf32>
    %405 = tpu.matmul %400, %2, %cst_203 {dimension_numbers = #tpu.dot_dimension_numbers<[1], [0], [0], [1], [0, 0, 1, 1], [], []>} : vector<4x32xf32>, vector<32x128xf32>, vector<4x128xf32> -> vector<4x128xf32>
    %406 = arith.index_cast %c7_i32 : i32 to index
    %c0_204 = arith.constant 0 : index
    %c0_205 = arith.constant 0 : index
    %407 = vector.load %arg7[%406, %c0_204, %c0_205] : memref<8x4x128xf32, #tpu.memory_space<vmem>>, vector<1x4x128xf32>
    %408 = vector.shape_cast %407 : vector<1x4x128xf32> to vector<4x128xf32>
    %409 = arith.addf %405, %408 : vector<4x128xf32>
    %410 = vector.extract_strided_slice %409 {offsets = [0, 0], sizes = [4, 96], strides = [1, 1]} : vector<4x128xf32> to vector<4x96xf32>
    %411 = arith.negf %410 : vector<4x96xf32>
    %412 = math.exp %411 : vector<4x96xf32>
    %cst_206 = arith.constant 1.000000e+00 : f32
    %413 = vector.broadcast %cst_206 : f32 to vector<4x96xf32>
    %414 = arith.addf %413, %412 : vector<4x96xf32>
    %415 = arith.divf %413, %414 : vector<4x96xf32>
    %416 = vector.extract_strided_slice %409 {offsets = [0, 96], sizes = [4, 32], strides = [1, 1]} : vector<4x128xf32> to vector<4x32xf32>
    %417 = math.tanh %416 : vector<4x32xf32>
    %418 = vector.extract_strided_slice %415 {offsets = [0, 0], sizes = [4, 32], strides = [1, 1]} : vector<4x96xf32> to vector<4x32xf32>
    %419 = vector.extract_strided_slice %415 {offsets = [0, 32], sizes = [4, 32], strides = [1, 1]} : vector<4x96xf32> to vector<4x32xf32>
    %420 = vector.extract_strided_slice %415 {offsets = [0, 64], sizes = [4, 32], strides = [1, 1]} : vector<4x96xf32> to vector<4x32xf32>
    %421 = arith.mulf %419, %398 : vector<4x32xf32>
    %422 = arith.mulf %418, %417 : vector<4x32xf32>
    %423 = arith.addf %421, %422 : vector<4x32xf32>
    %424 = math.tanh %423 : vector<4x32xf32>
    %425 = arith.mulf %420, %424 : vector<4x32xf32>
    %426 = arith.index_cast %c7_i32 : i32 to index
    %c0_207 = arith.constant 0 : index
    %c0_208 = arith.constant 0 : index
    %427 = vector.load %arg8[%426, %c0_207, %c0_208] : memref<8x4x32xf32, #tpu.memory_space<vmem>>, vector<1x4x32xf32>
    %428 = vector.shape_cast %427 : vector<1x4x32xf32> to vector<4x32xf32>
    %429 = vector.shape_cast %425 : vector<4x32xf32> to vector<1x4x32xf32>
    tpu.vector_store %arg8[%426, %c0_207, %c0_208], %429 {strides = array<i32>} : memref<8x4x32xf32, #tpu.memory_space<vmem>>, vector<1x4x32xf32>,
    %c8_i32 = arith.constant 8 : i32
    %c0_209 = arith.constant 0 : index
    %c0_210 = arith.constant 0 : index
    %c0_211 = arith.constant 0 : index
    %430 = vector.load %arg8[%c0_209, %c0_210, %c0_211] : memref<8x4x32xf32, #tpu.memory_space<vmem>>, vector<1x4x32xf32>
    %431 = vector.shape_cast %430 : vector<1x4x32xf32> to vector<4x32xf32>
    %cst_212 = arith.constant dense<0.000000e+00> : vector<1x4xf32>
    %432 = tpu.matmul %3, %431, %cst_212 {dimension_numbers = #tpu.dot_dimension_numbers<[1], [1], [0], [0], [0, 0, 1, 0], [], []>} : vector<1x32xf32>, vector<4x32xf32>, vector<1x4xf32> -> vector<1x4xf32>
    %433 = vector.broadcast %4 : f32 to vector<1x4xf32>
    %434 = arith.addf %432, %433 : vector<1x4xf32>
    %c0_213 = arith.constant 0 : index
    %c0_214 = arith.constant 0 : index
    %435 = vector.load %arg6[%c0_213, %c0_214] : memref<8x4xf32, #tpu.memory_space<vmem>>, vector<1x4xf32>
    tpu.vector_store %arg6[%c0_213, %c0_214], %434 {strides = array<i32>} : memref<8x4xf32, #tpu.memory_space<vmem>>, vector<1x4xf32>,
    %c1_215 = arith.constant 1 : index
    %c0_216 = arith.constant 0 : index
    %c0_217 = arith.constant 0 : index
    %436 = vector.load %arg8[%c1_215, %c0_216, %c0_217] : memref<8x4x32xf32, #tpu.memory_space<vmem>>, vector<1x4x32xf32>
    %437 = vector.shape_cast %436 : vector<1x4x32xf32> to vector<4x32xf32>
    %cst_218 = arith.constant dense<0.000000e+00> : vector<1x4xf32>
    %438 = tpu.matmul %3, %437, %cst_218 {dimension_numbers = #tpu.dot_dimension_numbers<[1], [1], [0], [0], [0, 0, 1, 0], [], []>} : vector<1x32xf32>, vector<4x32xf32>, vector<1x4xf32> -> vector<1x4xf32>
    %439 = vector.broadcast %4 : f32 to vector<1x4xf32>
    %440 = arith.addf %438, %439 : vector<1x4xf32>
    %c1_219 = arith.constant 1 : index
    %c0_220 = arith.constant 0 : index
    %441 = vector.load %arg6[%c1_219, %c0_220] : memref<8x4xf32, #tpu.memory_space<vmem>>, vector<1x4xf32>
    tpu.vector_store %arg6[%c1_219, %c0_220], %440 {strides = array<i32>} : memref<8x4xf32, #tpu.memory_space<vmem>>, vector<1x4xf32>,
    %c2_221 = arith.constant 2 : index
    %c0_222 = arith.constant 0 : index
    %c0_223 = arith.constant 0 : index
    %442 = vector.load %arg8[%c2_221, %c0_222, %c0_223] : memref<8x4x32xf32, #tpu.memory_space<vmem>>, vector<1x4x32xf32>
    %443 = vector.shape_cast %442 : vector<1x4x32xf32> to vector<4x32xf32>
    %cst_224 = arith.constant dense<0.000000e+00> : vector<1x4xf32>
    %444 = tpu.matmul %3, %443, %cst_224 {dimension_numbers = #tpu.dot_dimension_numbers<[1], [1], [0], [0], [0, 0, 1, 0], [], []>} : vector<1x32xf32>, vector<4x32xf32>, vector<1x4xf32> -> vector<1x4xf32>
    %445 = vector.broadcast %4 : f32 to vector<1x4xf32>
    %446 = arith.addf %444, %445 : vector<1x4xf32>
    %c2_225 = arith.constant 2 : index
    %c0_226 = arith.constant 0 : index
    %447 = vector.load %arg6[%c2_225, %c0_226] : memref<8x4xf32, #tpu.memory_space<vmem>>, vector<1x4xf32>
    tpu.vector_store %arg6[%c2_225, %c0_226], %446 {strides = array<i32>} : memref<8x4xf32, #tpu.memory_space<vmem>>, vector<1x4xf32>,
    %c3_227 = arith.constant 3 : index
    %c0_228 = arith.constant 0 : index
    %c0_229 = arith.constant 0 : index
    %448 = vector.load %arg8[%c3_227, %c0_228, %c0_229] : memref<8x4x32xf32, #tpu.memory_space<vmem>>, vector<1x4x32xf32>
    %449 = vector.shape_cast %448 : vector<1x4x32xf32> to vector<4x32xf32>
    %cst_230 = arith.constant dense<0.000000e+00> : vector<1x4xf32>
    %450 = tpu.matmul %3, %449, %cst_230 {dimension_numbers = #tpu.dot_dimension_numbers<[1], [1], [0], [0], [0, 0, 1, 0], [], []>} : vector<1x32xf32>, vector<4x32xf32>, vector<1x4xf32> -> vector<1x4xf32>
    %451 = vector.broadcast %4 : f32 to vector<1x4xf32>
    %452 = arith.addf %450, %451 : vector<1x4xf32>
    %c3_231 = arith.constant 3 : index
    %c0_232 = arith.constant 0 : index
    %453 = vector.load %arg6[%c3_231, %c0_232] : memref<8x4xf32, #tpu.memory_space<vmem>>, vector<1x4xf32>
    tpu.vector_store %arg6[%c3_231, %c0_232], %452 {strides = array<i32>} : memref<8x4xf32, #tpu.memory_space<vmem>>, vector<1x4xf32>,
    %c4_233 = arith.constant 4 : index
    %c0_234 = arith.constant 0 : index
    %c0_235 = arith.constant 0 : index
    %454 = vector.load %arg8[%c4_233, %c0_234, %c0_235] : memref<8x4x32xf32, #tpu.memory_space<vmem>>, vector<1x4x32xf32>
    %455 = vector.shape_cast %454 : vector<1x4x32xf32> to vector<4x32xf32>
    %cst_236 = arith.constant dense<0.000000e+00> : vector<1x4xf32>
    %456 = tpu.matmul %3, %455, %cst_236 {dimension_numbers = #tpu.dot_dimension_numbers<[1], [1], [0], [0], [0, 0, 1, 0], [], []>} : vector<1x32xf32>, vector<4x32xf32>, vector<1x4xf32> -> vector<1x4xf32>
    %457 = vector.broadcast %4 : f32 to vector<1x4xf32>
    %458 = arith.addf %456, %457 : vector<1x4xf32>
    %c4_237 = arith.constant 4 : index
    %c0_238 = arith.constant 0 : index
    %459 = vector.load %arg6[%c4_237, %c0_238] : memref<8x4xf32, #tpu.memory_space<vmem>>, vector<1x4xf32>
    tpu.vector_store %arg6[%c4_237, %c0_238], %458 {strides = array<i32>} : memref<8x4xf32, #tpu.memory_space<vmem>>, vector<1x4xf32>,
    %c5_239 = arith.constant 5 : index
    %c0_240 = arith.constant 0 : index
    %c0_241 = arith.constant 0 : index
    %460 = vector.load %arg8[%c5_239, %c0_240, %c0_241] : memref<8x4x32xf32, #tpu.memory_space<vmem>>, vector<1x4x32xf32>
    %461 = vector.shape_cast %460 : vector<1x4x32xf32> to vector<4x32xf32>
    %cst_242 = arith.constant dense<0.000000e+00> : vector<1x4xf32>
    %462 = tpu.matmul %3, %461, %cst_242 {dimension_numbers = #tpu.dot_dimension_numbers<[1], [1], [0], [0], [0, 0, 1, 0], [], []>} : vector<1x32xf32>, vector<4x32xf32>, vector<1x4xf32> -> vector<1x4xf32>
    %463 = vector.broadcast %4 : f32 to vector<1x4xf32>
    %464 = arith.addf %462, %463 : vector<1x4xf32>
    %c5_243 = arith.constant 5 : index
    %c0_244 = arith.constant 0 : index
    %465 = vector.load %arg6[%c5_243, %c0_244] : memref<8x4xf32, #tpu.memory_space<vmem>>, vector<1x4xf32>
    tpu.vector_store %arg6[%c5_243, %c0_244], %464 {strides = array<i32>} : memref<8x4xf32, #tpu.memory_space<vmem>>, vector<1x4xf32>,
    %c6_245 = arith.constant 6 : index
    %c0_246 = arith.constant 0 : index
    %c0_247 = arith.constant 0 : index
    %466 = vector.load %arg8[%c6_245, %c0_246, %c0_247] : memref<8x4x32xf32, #tpu.memory_space<vmem>>, vector<1x4x32xf32>
    %467 = vector.shape_cast %466 : vector<1x4x32xf32> to vector<4x32xf32>
    %cst_248 = arith.constant dense<0.000000e+00> : vector<1x4xf32>
    %468 = tpu.matmul %3, %467, %cst_248 {dimension_numbers = #tpu.dot_dimension_numbers<[1], [1], [0], [0], [0, 0, 1, 0], [], []>} : vector<1x32xf32>, vector<4x32xf32>, vector<1x4xf32> -> vector<1x4xf32>
    %469 = vector.broadcast %4 : f32 to vector<1x4xf32>
    %470 = arith.addf %468, %469 : vector<1x4xf32>
    %c6_249 = arith.constant 6 : index
    %c0_250 = arith.constant 0 : index
    %471 = vector.load %arg6[%c6_249, %c0_250] : memref<8x4xf32, #tpu.memory_space<vmem>>, vector<1x4xf32>
    tpu.vector_store %arg6[%c6_249, %c0_250], %470 {strides = array<i32>} : memref<8x4xf32, #tpu.memory_space<vmem>>, vector<1x4xf32>,
    %c7_251 = arith.constant 7 : index
    %c0_252 = arith.constant 0 : index
    %c0_253 = arith.constant 0 : index
    %472 = vector.load %arg8[%c7_251, %c0_252, %c0_253] : memref<8x4x32xf32, #tpu.memory_space<vmem>>, vector<1x4x32xf32>
    %473 = vector.shape_cast %472 : vector<1x4x32xf32> to vector<4x32xf32>
    %cst_254 = arith.constant dense<0.000000e+00> : vector<1x4xf32>
    %474 = tpu.matmul %3, %473, %cst_254 {dimension_numbers = #tpu.dot_dimension_numbers<[1], [1], [0], [0], [0, 0, 1, 0], [], []>} : vector<1x32xf32>, vector<4x32xf32>, vector<1x4xf32> -> vector<1x4xf32>
    %475 = vector.broadcast %4 : f32 to vector<1x4xf32>
    %476 = arith.addf %474, %475 : vector<1x4xf32>
    %c7_255 = arith.constant 7 : index
    %c0_256 = arith.constant 0 : index
    %477 = vector.load %arg6[%c7_255, %c0_256] : memref<8x4xf32, #tpu.memory_space<vmem>>, vector<1x4xf32>
    tpu.vector_store %arg6[%c7_255, %c0_256], %476 {strides = array<i32>} : memref<8x4xf32, #tpu.memory_space<vmem>>, vector<1x4xf32>,
    return
  }
}

</mosaic_0001>

<llo_original>
// kernel: net_forward.1
$region0: #{net_forward.1}
  #allocation0 [shape = 'u32[]', space=smem, size = 0x4, offset = 0x4, fixed_abs, tag = 'smem constant byte address 0x4 - core index']
  #allocation1 [shape = 'u32[144,128]{1,0:T(1,128)}', space=vmem, size = 0x12000, scoped, tag = 'internal scratch']
  #allocation2 [shape = 'f32[8,4,128]{2,1,0:T(4,128)}', space=vmem, size = 0x4000, scoped, tag = 'scratch operand']
  #allocation3 [shape = 'f32[8,4,32]{2,1,0:T(4,128)}', space=vmem, size = 0x4000, scoped, tag = 'scratch operand']
  #allocation4 [shape = 'f32[1]{0:T(128)S(6)}', space=smem, size = 0x200, scoped, tag = 'scoped memory for net_forward.1']
  %s0 = inlined_call_operand.vmem [shape: f32[8,4], index: 0, kind: input, shape index: {}]
  %s1 = inlined_call_operand.vmem [shape: f32[1,128], index: 1, kind: input, shape index: {}]
  %s2 = inlined_call_operand.vmem [shape: f32[1,128], index: 2, kind: input, shape index: {}]
  %s3 = inlined_call_operand.hbm [shape: f32[32,128], index: 3, kind: input, shape index: {}]
  %s4 = inlined_call_operand.vmem [shape: f32[1,32], index: 4, kind: input, shape index: {}]
  %s5 = inlined_call_operand.<no memory space> [shape: f32[1], index: 5, kind: input, shape index: {}]
  %s6 = inlined_call_operand.vmem [shape: f32[8,4], index: 6, kind: output, shape index: {}]
  %s7 = sld [smem:[#allocation0]]
  $region42: #{net_forward.1} parent=0
    _
  %s9 = ssub.s32 1, %s7
  %s10 = scalar_select 0, %s9, %s7
  %11 = sst [smem:[#allocation4]] %s5
  $region1: #{net_forward.1} parent=0
    #allocation5 [shape = 'u8[4096]{0}', space=smem, size = 0x1000, scoped, tag = 'input window, operand 0, single buffered']
    #allocation6 [shape = 's32[1]{0}', space=sflag, size = 0x4, scoped, tag = 'scoped memory for net_forward.1']
    #allocation7 [shape = 's32[1]{0}', space=sflag, size = 0x4, scoped, tag = 'scoped memory for net_forward.1']
    #allocation8 [shape = 'u8[16384]{0}', space=vmem, size = 0x4000, scoped, tag = 'input window, operand 3, single buffered']
    %12 = vsyncpa [#allocation7], 0
    %13 = vsyncpa [#allocation6], 0
    // Predicated region
    $region2: #{net_forward.1} parent=1 // pred_check
      _
    $region3: #{net_forward.1} parent=1 // pred_check_branch
      %15 = sbr.rel (0) target = $region5
    $region4: #{net_forward.1} parent=1 // pred_region
      %s17 = ssub.s32 128, 128
      %18 = vsyncadd [#allocation7], %s17
      %s20 = sshll.u32 %s0, 4
      %s21 = int_to_ptr.vmem [resolvable:$true] %s20
      %23 = dma.vmem_to_smem %s21, 128, [#allocation5], [#allocation7]
    $region5: #{net_forward.1} parent=1 // pred_fallthru
      _
    // Predicated region
    $region6: #{net_forward.1} parent=1 // pred_check
      _
    $region7: #{net_forward.1} parent=1 // pred_check_branch
      %25 = sbr.rel (0) target = $region9
    $region8: #{net_forward.1} parent=1 // pred_region
      _
    $region9: #{net_forward.1} parent=1 // pred_fallthru
      _
    // Predicated region
    $region10: #{net_forward.1} parent=1 // pred_check
      _
    $region11: #{net_forward.1} parent=1 // pred_check_branch
      %27 = sbr.rel (0) target = $region13
    $region12: #{net_forward.1} parent=1 // pred_region
      _
    $region13: #{net_forward.1} parent=1 // pred_fallthru
      _
    // Predicated region
    $region14: #{net_forward.1} parent=1 // pred_check
      _
    $region15: #{net_forward.1} parent=1 // pred_check_branch
      %29 = sbr.rel (0) target = $region17
    $region16: #{net_forward.1} parent=1 // pred_region
      %s31 = ssub.s32 512, 512
      %32 = vsyncadd [#allocation6], %s31
      %s33 = sshll.u32 [#allocation8], 4
      %s34 = int_to_ptr.vmem [resolvable:$true] %s33
      %39 = dma.hbm_to_vmem [thread:$0]  %s3, 512, %s34, [#allocation6], 128, 128, 8
    $region17: #{net_forward.1} parent=1 // pred_fallthru
      _
    // Predicated region
    $region18: #{net_forward.1} parent=1 // pred_check
      _
    $region19: #{net_forward.1} parent=1 // pred_check_branch
      %41 = sbr.rel (0) target = $region21
    $region20: #{net_forward.1} parent=1 // pred_region
      _
    $region21: #{net_forward.1} parent=1 // pred_fallthru
      _
    // Predicated region
    $region22: #{net_forward.1} parent=1 // pred_check
      _
    $region23: #{net_forward.1} parent=1 // pred_check_branch
      %43 = sbr.rel (0) target = $region25
    $region24: #{net_forward.1} parent=1 // pred_region
      _
    $region25: #{net_forward.1} parent=1 // pred_fallthru
      _
    // Predicated region
    $region26: #{net_forward.1} parent=1 // pred_check
      _
    $region27: #{net_forward.1} parent=1 // pred_check_branch
      %45 = sbr.rel (0) target = $region29
    $region28: #{net_forward.1} parent=1 // pred_region
      %46 = dma.done [#allocation7], 128
    $region29: #{net_forward.1} parent=1 // pred_fallthru
      _
    // Predicated region
    $region30: #{net_forward.1} parent=1 // pred_check
      _
    $region31: #{net_forward.1} parent=1 // pred_check_branch
      %48 = sbr.rel (0) target = $region33
    $region32: #{net_forward.1} parent=1 // pred_region
      %49 = dma.done [#allocation6], 512
    $region33: #{net_forward.1} parent=1 // pred_fallthru
      _
    %50 = sfence
    %v51 = vld [vmem:[%s1] sm:$0x1]
    %v52 = vld [vmem:[%s2] sm:$0x1]
    %v53 = vld [vmem:[#allocation8] sm:$0xff]
    %v54 = vld [vmem:[#allocation8 + $0x8] sm:$0xff]
    %v55 = vld [vmem:[#allocation8 + $0x10] sm:$0xff]
    %v56 = vld [vmem:[#allocation8 + $0x18] sm:$0xff]
    %v57 = vld [vmem:[%s4] sm:$0x1]
    %s58 = sld [smem:[#allocation4]]
    %s59 = sld [smem:[#allocation5]]
    %v60 = vstv %s59
    %v61 = vmul.f32 %v60, %v51
    %v62 = vadd.f32 %v61, %v52
    %63 = vst [vmem:[#allocation2] sm:$0x1] %v62
    %s64 = sld [smem:[#allocation5 + $0x1]]
    %v65 = vstv %s64
    %v66 = vmul.f32 %v65, %v51
    %v67 = vadd.f32 %v66, %v52
    %68 = vst [vmem:[#allocation2 + $0x1] sm:$0x1] %v67
    %s69 = sld [smem:[#allocation5 + $0x2]]
    %v70 = vstv %s69
    %v71 = vmul.f32 %v70, %v51
    %v72 = vadd.f32 %v71, %v52
    %73 = vst [vmem:[#allocation2 + $0x2] sm:$0x1] %v72
    %s74 = sld [smem:[#allocation5 + $0x3]]
    %v75 = vstv %s74
    %v76 = vmul.f32 %v75, %v51
    %v77 = vadd.f32 %v76, %v52
    %78 = vst [vmem:[#allocation2 + $0x3] sm:$0x1] %v77
    %s79 = sld [smem:[#allocation5 + $0x80]]
    %v80 = vstv %s79
    %v81 = vmul.f32 %v80, %v51
    %v82 = vadd.f32 %v81, %v52
    %s83 = scalar_lea.vmem [#allocation2], 4
    %84 = vst [vmem:[%s83] sm:$0x1] %v82
    %s85 = sld [smem:[#allocation5 + $0x81]]
    %v86 = vstv %s85
    %v87 = vmul.f32 %v86, %v51
    %v88 = vadd.f32 %v87, %v52
    %89 = vst [vmem:[%s83 + $0x1] sm:$0x1] %v88
    %s90 = sld [smem:[#allocation5 + $0x82]]
    %v91 = vstv %s90
    %v92 = vmul.f32 %v91, %v51
    %v93 = vadd.f32 %v92, %v52
    %94 = vst [vmem:[%s83 + $0x2] sm:$0x1] %v93
    %s95 = sld [smem:[#allocation5 + $0x83]]
    %v96 = vstv %s95
    %v97 = vmul.f32 %v96, %v51
    %v98 = vadd.f32 %v97, %v52
    %99 = vst [vmem:[%s83 + $0x3] sm:$0x1] %v98
    %s100 = sld [smem:[#allocation5 + $0x100]]
    %v101 = vstv %s100
    %v102 = vmul.f32 %v101, %v51
    %v103 = vadd.f32 %v102, %v52
    %s104 = scalar_lea.vmem [#allocation2], 8
    %105 = vst [vmem:[%s104] sm:$0x1] %v103
    %s106 = sld [smem:[#allocation5 + $0x101]]
    %v107 = vstv %s106
    %v108 = vmul.f32 %v107, %v51
    %v109 = vadd.f32 %v108, %v52
    %110 = vst [vmem:[%s104 + $0x1] sm:$0x1] %v109
    %s111 = sld [smem:[#allocation5 + $0x102]]
    %v112 = vstv %s111
    %v113 = vmul.f32 %v112, %v51
    %v114 = vadd.f32 %v113, %v52
    %115 = vst [vmem:[%s104 + $0x2] sm:$0x1] %v114
    %s116 = sld [smem:[#allocation5 + $0x103]]
    %v117 = vstv %s116
    %v118 = vmul.f32 %v117, %v51
    %v119 = vadd.f32 %v118, %v52
    %120 = vst [vmem:[%s104 + $0x3] sm:$0x1] %v119
    %s121 = sld [smem:[#allocation5 + $0x180]]
    %v122 = vstv %s121
    %v123 = vmul.f32 %v122, %v51
    %v124 = vadd.f32 %v123, %v52
    %s125 = scalar_lea.vmem [#allocation2], 12
    %126 = vst [vmem:[%s125] sm:$0x1] %v124
    %s127 = sld [smem:[#allocation5 + $0x181]]
    %v128 = vstv %s127
    %v129 = vmul.f32 %v128, %v51
    %v130 = vadd.f32 %v129, %v52
    %131 = vst [vmem:[%s125 + $0x1] sm:$0x1] %v130
    %s132 = sld [smem:[#allocation5 + $0x182]]
    %v133 = vstv %s132
    %v134 = vmul.f32 %v133, %v51
    %v135 = vadd.f32 %v134, %v52
    %136 = vst [vmem:[%s125 + $0x2] sm:$0x1] %v135
    %s137 = sld [smem:[#allocation5 + $0x183]]
    %v138 = vstv %s137
    %v139 = vmul.f32 %v138, %v51
    %v140 = vadd.f32 %v139, %v52
    %141 = vst [vmem:[%s125 + $0x3] sm:$0x1] %v140
    %s142 = sld [smem:[#allocation5 + $0x200]]
    %v143 = vstv %s142
    %v144 = vmul.f32 %v143, %v51
    %v145 = vadd.f32 %v144, %v52
    %s146 = scalar_lea.vmem [#allocation2], 16
    %147 = vst [vmem:[%s146] sm:$0x1] %v145
    %s148 = sld [smem:[#allocation5 + $0x201]]
    %v149 = vstv %s148
    %v150 = vmul.f32 %v149, %v51
    %v151 = vadd.f32 %v150, %v52
    %152 = vst [vmem:[%s146 + $0x1] sm:$0x1] %v151
    %s153 = sld [smem:[#allocation5 + $0x202]]
    %v154 = vstv %s153
    %v155 = vmul.f32 %v154, %v51
    %v156 = vadd.f32 %v155, %v52
    %157 = vst [vmem:[%s146 + $0x2] sm:$0x1] %v156
    %s158 = sld [smem:[#allocation5 + $0x203]]
    %v159 = vstv %s158
    %v160 = vmul.f32 %v159, %v51
    %v161 = vadd.f32 %v160, %v52
    %162 = vst [vmem:[%s146 + $0x3] sm:$0x1] %v161
    %s163 = sld [smem:[#allocation5 + $0x280]]
    %v164 = vstv %s163
    %v165 = vmul.f32 %v164, %v51
    %v166 = vadd.f32 %v165, %v52
    %s167 = scalar_lea.vmem [#allocation2], 20
    %168 = vst [vmem:[%s167] sm:$0x1] %v166
    %s169 = sld [smem:[#allocation5 + $0x281]]
    %v170 = vstv %s169
    %v171 = vmul.f32 %v170, %v51
    %v172 = vadd.f32 %v171, %v52
    %173 = vst [vmem:[%s167 + $0x1] sm:$0x1] %v172
    %s174 = sld [smem:[#allocation5 + $0x282]]
    %v175 = vstv %s174
    %v176 = vmul.f32 %v175, %v51
    %v177 = vadd.f32 %v176, %v52
    %178 = vst [vmem:[%s167 + $0x2] sm:$0x1] %v177
    %s179 = sld [smem:[#allocation5 + $0x283]]
    %v180 = vstv %s179
    %v181 = vmul.f32 %v180, %v51
    %v182 = vadd.f32 %v181, %v52
    %183 = vst [vmem:[%s167 + $0x3] sm:$0x1] %v182
    %s184 = sld [smem:[#allocation5 + $0x300]]
    %v185 = vstv %s184
    %v186 = vmul.f32 %v185, %v51
    %v187 = vadd.f32 %v186, %v52
    %s188 = scalar_lea.vmem [#allocation2], 24
    %189 = vst [vmem:[%s188] sm:$0x1] %v187
    %s190 = sld [smem:[#allocation5 + $0x301]]
    %v191 = vstv %s190
    %v192 = vmul.f32 %v191, %v51
    %v193 = vadd.f32 %v192, %v52
    %194 = vst [vmem:[%s188 + $0x1] sm:$0x1] %v193
    %s195 = sld [smem:[#allocation5 + $0x302]]
    %v196 = vstv %s195
    %v197 = vmul.f32 %v196, %v51
    %v198 = vadd.f32 %v197, %v52
    %199 = vst [vmem:[%s188 + $0x2] sm:$0x1] %v198
    %s200 = sld [smem:[#allocation5 + $0x303]]
    %v201 = vstv %s200
    %v202 = vmul.f32 %v201, %v51
    %v203 = vadd.f32 %v202, %v52
    %204 = vst [vmem:[%s188 + $0x3] sm:$0x1] %v203
    %s205 = sld [smem:[#allocation5 + $0x380]]
    %v206 = vstv %s205
    %v207 = vmul.f32 %v206, %v51
    %v208 = vadd.f32 %v207, %v52
    %s209 = scalar_lea.vmem [#allocation2], 28
    %210 = vst [vmem:[%s209] sm:$0x1] %v208
    %s211 = sld [smem:[#allocation5 + $0x381]]
    %v212 = vstv %s211
    %v213 = vmul.f32 %v212, %v51
    %v214 = vadd.f32 %v213, %v52
    %215 = vst [vmem:[%s209 + $0x1] sm:$0x1] %v214
    %s216 = sld [smem:[#allocation5 + $0x382]]
    %v217 = vstv %s216
    %v218 = vmul.f32 %v217, %v51
    %v219 = vadd.f32 %v218, %v52
    %220 = vst [vmem:[%s209 + $0x2] sm:$0x1] %v219
    %s221 = sld [smem:[#allocation5 + $0x383]]
    %v222 = vstv %s221
    %v223 = vmul.f32 %v222, %v51
    %v224 = vadd.f32 %v223, %v52
    %225 = vst [vmem:[%s209 + $0x3] sm:$0x1] %v224
    %v226 = vld [vmem:[#allocation2] sm:$0xf]
    %vm227 = vcmask 261120
    %v229 = vsel %vm227, 0.0, 0
    %231 = vmatprep.subr.mxu0 0.0
    %232 = vmatpush1.msra.mxu0 %v53
    %233 = vmatprep.subr.mxu0 0.0
    %234 = vmatpush1.msra.mxu0 %v54
    %235 = vmatprep.subr.mxu0 0.0
    %236 = vmatpush1.msra.mxu0 %v55
    %237 = vmatprep.subr.mxu0 0.0
    %238 = vmatpush1.msra.mxu0 %v56
    %239 = vmatprep.subr.mxu0 0.0
    %240 = vmatpush1.msra.mxu0 0.0
    %241 = vmatprep.subr.mxu0 0.0
    %242 = vmatpush1.msra.mxu0 0.0
    %243 = vmatprep.subr.mxu0 0.0
    %244 = vmatpush1.msra.mxu0 0.0
    %245 = vmatprep.subr.mxu0 0.0
    %246 = vmatpush1.msra.mxu0 0.0
    %247 = vmatprep.subr.mxu0 0.0
    %248 = vmatpush1.msra.mxu0 0.0
    %249 = vmatprep.subr.mxu0 0.0
    %250 = vmatpush1.msra.mxu0 0.0
    %251 = vmatprep.subr.mxu0 0.0
    %252 = vmatpush1.msra.mxu0 0.0
    %253 = vmatprep.subr.mxu0 0.0
    %254 = vmatpush1.msra.mxu0 0.0
    %255 = vmatprep.subr.mxu0 0.0
    %256 = vmatpush1.msra.mxu0 0.0
    %257 = vmatprep.subr.mxu0 0.0
    %258 = vmatpush1.msra.mxu0 0.0
    %259 = vmatprep.subr.mxu0 0.0
    %260 = vmatpush1.msra.mxu0 0.0
    %261 = vmatprep.subr.mxu0 0.0
    %262 = vmatpush1.msra.mxu0 0.0
    %263 = vmatprep.subr.mxu0 0.0
    %264 = vmatpush1.msra.mxu0 0.0
    %265 = vmatprep.subr.mxu0 0.0
    %266 = vmatpush1.msra.mxu0 0.0
    %267 = vmatprep.subr.mxu0 0.0
    %268 = vmatpush1.msra.mxu0 0.0
    %269 = vmatprep.subr.mxu0 0.0
    %270 = vmatpush1.msra.mxu0 0.0
    %271 = vmatprep.subr.mxu0 0.0
    %272 = vmatpush1.msra.mxu0 0.0
    %273 = vmatprep.subr.mxu0 0.0
    %274 = vmatpush1.msra.mxu0 0.0
    %275 = vmatprep.subr.mxu0 0.0
    %276 = vmatpush1.msra.mxu0 0.0
    %277 = vmatprep.subr.mxu0 0.0
    %278 = vmatpush1.msra.mxu0 0.0
    %279 = vmatprep.subr.mxu0 0.0
    %280 = vmatpush1.msra.mxu0 0.0
    %281 = vmatprep.subr.mxu0 0.0
    %282 = vmatpush1.msra.mxu0 0.0
    %283 = vmatprep.subr.mxu0 0.0
    %284 = vmatpush1.msra.mxu0 0.0
    %285 = vmatprep.subr.mxu0 0.0
    %286 = vmatpush1.msra.mxu0 0.0
    %287 = vmatprep.subr.mxu0 0.0
    %288 = vmatpush1.msra.mxu0 0.0
    %289 = vmatprep.subr.mxu0 0.0
    %290 = vmatpush1.msra.mxu0 0.0
    %291 = vmatprep.subr.mxu0 0.0
    %292 = vmatpush1.msra.mxu0 0.0
    %293 = vmatprep.subr.mxu0 0.0
    %294 = vmatpush1.msra.mxu0 0.0
    %295 = vmatprep.mubr.f32.mxu0 0.0
    %296 = vmatmul.mubr.f32.gmra.mrb[0].mxu0 %v229
    %v297 = vpop.f32.mrb[0].mxu0
    %v298 = vadd.f32 %v226, %v297
    %v299 = vpop.f32.mrb[0].mxu0
    %300 = vdwg.mxu0
    %v301 = vxor.u32 %v298, 2147483648
    %v302 = vmul.f32 %v301, 1.442695
    %v303 = vpow.pop %v302
    %v304 = vadd.f32 %v303, 1.0
    %v305 = vrcp.pop %v304
    %v306 = vmul.f32 1.0, %v305
    %v307 = vtanh.pop %v298
    %v308 = vmul.f32 %v306, 0.0
    %310 = vrot.lane.b32.xlu0 %v307, 32
    %v311 = vpop.permute.xlu0 %310
    %v313 = vmul.f32 %v306, %v311
    %315 = vrot.lane.b32.xlu0 %v313, 32
    %v316 = vpop.permute.xlu0 %315
    %v318 = vadd.f32 %v308, %v316
    %v319 = vtanh.pop %v318
    %321 = vrot.lane.b32.xlu0 %v319, 32
    %v322 = vpop.permute.xlu0 %321
    %v324 = vmul.f32 %v306, %v322
    %326 = vrot.lane.b32.xlu0 %v324, 64
    %v327 = vpop.permute.xlu0 %326
    %vm329 = vcmask 257024
    %330 = vst.msk [vmem:[#allocation3] sm:$0xf] %vm329, %v327
    %v331 = vld [vmem:[%s83] sm:$0xf]
    %v332 = vsel %vm227, %v327, 0
    %334 = vmatprep.subr.mxu0 0.0
    %335 = vmatpush1.msra.mxu0 %v53
    %336 = vmatprep.subr.mxu0 0.0
    %337 = vmatpush1.msra.mxu0 %v54
    %338 = vmatprep.subr.mxu0 0.0
    %339 = vmatpush1.msra.mxu0 %v55
    %340 = vmatprep.subr.mxu0 0.0
    %341 = vmatpush1.msra.mxu0 %v56
    %342 = vmatprep.subr.mxu0 0.0
    %343 = vmatpush1.msra.mxu0 0.0
    %344 = vmatprep.subr.mxu0 0.0
    %345 = vmatpush1.msra.mxu0 0.0
    %346 = vmatprep.subr.mxu0 0.0
    %347 = vmatpush1.msra.mxu0 0.0
    %348 = vmatprep.subr.mxu0 0.0
    %349 = vmatpush1.msra.mxu0 0.0
    %350 = vmatprep.subr.mxu0 0.0
    %351 = vmatpush1.msra.mxu0 0.0
    %352 = vmatprep.subr.mxu0 0.0
    %353 = vmatpush1.msra.mxu0 0.0
    %354 = vmatprep.subr.mxu0 0.0
    %355 = vmatpush1.msra.mxu0 0.0
    %356 = vmatprep.subr.mxu0 0.0
    %357 = vmatpush1.msra.mxu0 0.0
    %358 = vmatprep.subr.mxu0 0.0
    %359 = vmatpush1.msra.mxu0 0.0
    %360 = vmatprep.subr.mxu0 0.0
    %361 = vmatpush1.msra.mxu0 0.0
    %362 = vmatprep.subr.mxu0 0.0
    %363 = vmatpush1.msra.mxu0 0.0
    %364 = vmatprep.subr.mxu0 0.0
    %365 = vmatpush1.msra.mxu0 0.0
    %366 = vmatprep.subr.mxu0 0.0
    %367 = vmatpush1.msra.mxu0 0.0
    %368 = vmatprep.subr.mxu0 0.0
    %369 = vmatpush1.msra.mxu0 0.0
    %370 = vmatprep.subr.mxu0 0.0
    %371 = vmatpush1.msra.mxu0 0.0
    %372 = vmatprep.subr.mxu0 0.0
    %373 = vmatpush1.msra.mxu0 0.0
    %374 = vmatprep.subr.mxu0 0.0
    %375 = vmatpush1.msra.mxu0 0.0
    %376 = vmatprep.subr.mxu0 0.0
    %377 = vmatpush1.msra.mxu0 0.0
    %378 = vmatprep.subr.mxu0 0.0
    %379 = vmatpush1.msra.mxu0 0.0
    %380 = vmatprep.subr.mxu0 0.0
    %381 = vmatpush1.msra.mxu0 0.0
    %382 = vmatprep.subr.mxu0 0.0
    %383 = vmatpush1.msra.mxu0 0.0
    %384 = vmatprep.subr.mxu0 0.0
    %385 = vmatpush1.msra.mxu0 0.0
    %386 = vmatprep.subr.mxu0 0.0
    %387 = vmatpush1.msra.mxu0 0.0
    %388 = vmatprep.subr.mxu0 0.0
    %389 = vmatpush1.msra.mxu0 0.0
    %390 = vmatprep.subr.mxu0 0.0
    %391 = vmatpush1.msra.mxu0 0.0
    %392 = vmatprep.subr.mxu0 0.0
    %393 = vmatpush1.msra.mxu0 0.0
    %394 = vmatprep.subr.mxu0 0.0
    %395 = vmatpush1.msra.mxu0 0.0
    %396 = vmatprep.subr.mxu0 0.0
    %397 = vmatpush1.msra.mxu0 0.0
    %398 = vmatprep.mubr.f32.mxu0 0.0
    %399 = vmatmul.mubr.f32.gmra.mrb[0].mxu0 %v332
    %v400 = vpop.f32.mrb[0].mxu0
    %v401 = vadd.f32 %v331, %v400
    %v402 = vpop.f32.mrb[0].mxu0
    %403 = vdwg.mxu0
    %v404 = vxor.u32 %v401, 2147483648
    %v405 = vmul.f32 %v404, 1.442695
    %v406 = vpow.pop %v405
    %v407 = vadd.f32 %v406, 1.0
    %v408 = vrcp.pop %v407
    %v409 = vmul.f32 1.0, %v408
    %v410 = vtanh.pop %v401
    %v411 = vmul.f32 %v409, %v318
    %413 = vrot.lane.b32.xlu0 %v410, 32
    %v414 = vpop.permute.xlu0 %413
    %v416 = vmul.f32 %v409, %v414
    %418 = vrot.lane.b32.xlu0 %v416, 32
    %v419 = vpop.permute.xlu0 %418
    %v421 = vadd.f32 %v411, %v419
    %v422 = vtanh.pop %v421
    %424 = vrot.lane.b32.xlu0 %v422, 32
    %v425 = vpop.permute.xlu0 %424
    %v427 = vmul.f32 %v409, %v425
    %429 = vrot.lane.b32.xlu0 %v427, 64
    %v430 = vpop.permute.xlu0 %429
    %s432 = scalar_lea.vmem [#allocation3], 4
    %433 = vst.msk [vmem:[%s432] sm:$0xf] %vm329, %v430
    %v434 = vld [vmem:[%s104] sm:$0xf]
    %v435 = vsel %vm227, %v430, 0
    %437 = vmatprep.subr.mxu0 0.0
    %438 = vmatpush1.msra.mxu0 %v53
    %439 = vmatprep.subr.mxu0 0.0
    %440 = vmatpush1.msra.mxu0 %v54
    %441 = vmatprep.subr.mxu0 0.0
    %442 = vmatpush1.msra.mxu0 %v55
    %443 = vmatprep.subr.mxu0 0.0
    %444 = vmatpush1.msra.mxu0 %v56
    %445 = vmatprep.subr.mxu0 0.0
    %446 = vmatpush1.msra.mxu0 0.0
    %447 = vmatprep.subr.mxu0 0.0
    %448 = vmatpush1.msra.mxu0 0.0
    %449 = vmatprep.subr.mxu0 0.0
    %450 = vmatpush1.msra.mxu0 0.0
    %451 = vmatprep.subr.mxu0 0.0
    %452 = vmatpush1.msra.mxu0 0.0
    %453 = vmatprep.subr.mxu0 0.0
    %454 = vmatpush1.msra.mxu0 0.0
    %455 = vmatprep.subr.mxu0 0.0
    %456 = vmatpush1.msra.mxu0 0.0
    %457 = vmatprep.subr.mxu0 0.0
    %458 = vmatpush1.msra.mxu0 0.0
    %459 = vmatprep.subr.mxu0 0.0
    %460 = vmatpush1.msra.mxu0 0.0
    %461 = vmatprep.subr.mxu0 0.0
    %462 = vmatpush1.msra.mxu0 0.0
    %463 = vmatprep.subr.mxu0 0.0
    %464 = vmatpush1.msra.mxu0 0.0
    %465 = vmatprep.subr.mxu0 0.0
    %466 = vmatpush1.msra.mxu0 0.0
    %467 = vmatprep.subr.mxu0 0.0
    %468 = vmatpush1.msra.mxu0 0.0
    %469 = vmatprep.subr.mxu0 0.0
    %470 = vmatpush1.msra.mxu0 0.0
    %471 = vmatprep.subr.mxu0 0.0
    %472 = vmatpush1.msra.mxu0 0.0
    %473 = vmatprep.subr.mxu0 0.0
    %474 = vmatpush1.msra.mxu0 0.0
    %475 = vmatprep.subr.mxu0 0.0
    %476 = vmatpush1.msra.mxu0 0.0
    %477 = vmatprep.subr.mxu0 0.0
    %478 = vmatpush1.msra.mxu0 0.0
    %479 = vmatprep.subr.mxu0 0.0
    %480 = vmatpush1.msra.mxu0 0.0
    %481 = vmatprep.subr.mxu0 0.0
    %482 = vmatpush1.msra.mxu0 0.0
    %483 = vmatprep.subr.mxu0 0.0
    %484 = vmatpush1.msra.mxu0 0.0
    %485 = vmatprep.subr.mxu0 0.0
    %486 = vmatpush1.msra.mxu0 0.0
    %487 = vmatprep.subr.mxu0 0.0
    %488 = vmatpush1.msra.mxu0 0.0
    %489 = vmatprep.subr.mxu0 0.0
    %490 = vmatpush1.msra.mxu0 0.0
    %491 = vmatprep.subr.mxu0 0.0
    %492 = vmatpush1.msra.mxu0 0.0
    %493 = vmatprep.subr.mxu0 0.0
    %494 = vmatpush1.msra.mxu0 0.0
    %495 = vmatprep.subr.mxu0 0.0
    %496 = vmatpush1.msra.mxu0 0.0
    %497 = vmatprep.subr.mxu0 0.0
    %498 = vmatpush1.msra.mxu0 0.0
    %499 = vmatprep.subr.mxu0 0.0
    %500 = vmatpush1.msra.mxu0 0.0
    %501 = vmatprep.mubr.f32.mxu0 0.0
    %502 = vmatmul.mubr.f32.gmra.mrb[0].mxu0 %v435
    %v503 = vpop.f32.mrb[0].mxu0
    %v504 = vadd.f32 %v434, %v503
    %v505 = vpop.f32.mrb[0].mxu0
    %506 = vdwg.mxu0
    %v507 = vxor.u32 %v504, 2147483648
    %v508 = vmul.f32 %v507, 1.442695
    %v509 = vpow.pop %v508
    %v510 = vadd.f32 %v509, 1.0
    %v511 = vrcp.pop %v510
    %v512 = vmul.f32 1.0, %v511
    %v513 = vtanh.pop %v504
    %v514 = vmul.f32 %v512, %v421
    %516 = vrot.lane.b32.xlu0 %v513, 32
    %v517 = vpop.permute.xlu0 %516
    %v519 = vmul.f32 %v512, %v517
    %521 = vrot.lane.b32.xlu0 %v519, 32
    %v522 = vpop.permute.xlu0 %521
    %v524 = vadd.f32 %v514, %v522
    %v525 = vtanh.pop %v524
    %527 = vrot.lane.b32.xlu0 %v525, 32
    %v528 = vpop.permute.xlu0 %527
    %v530 = vmul.f32 %v512, %v528
    %532 = vrot.lane.b32.xlu0 %v530, 64
    %v533 = vpop.permute.xlu0 %532
    %s535 = scalar_lea.vmem [#allocation3], 8
    %536 = vst.msk [vmem:[%s535] sm:$0xf] %vm329, %v533
    %v537 = vld [vmem:[%s125] sm:$0xf]
    %v538 = vsel %vm227, %v533, 0
    %540 = vmatprep.subr.mxu0 0.0
    %541 = vmatpush1.msra.mxu0 %v53
    %542 = vmatprep.subr.mxu0 0.0
    %543 = vmatpush1.msra.mxu0 %v54
    %544 = vmatprep.subr.mxu0 0.0
    %545 = vmatpush1.msra.mxu0 %v55
    %546 = vmatprep.subr.mxu0 0.0
    %547 = vmatpush1.msra.mxu0 %v56
    %548 = vmatprep.subr.mxu0 0.0
    %549 = vmatpush1.msra.mxu0 0.0
    %550 = vmatprep.subr.mxu0 0.0
    %551 = vmatpush1.msra.mxu0 0.0
    %552 = vmatprep.subr.mxu0 0.0
    %553 = vmatpush1.msra.mxu0 0.0
    %554 = vmatprep.subr.mxu0 0.0
    %555 = vmatpush1.msra.mxu0 0.0
    %556 = vmatprep.subr.mxu0 0.0
    %557 = vmatpush1.msra.mxu0 0.0
    %558 = vmatprep.subr.mxu0 0.0
    %559 = vmatpush1.msra.mxu0 0.0
    %560 = vmatprep.subr.mxu0 0.0
    %561 = vmatpush1.msra.mxu0 0.0
    %562 = vmatprep.subr.mxu0 0.0
    %563 = vmatpush1.msra.mxu0 0.0
    %564 = vmatprep.subr.mxu0 0.0
    %565 = vmatpush1.msra.mxu0 0.0
    %566 = vmatprep.subr.mxu0 0.0
    %567 = vmatpush1.msra.mxu0 0.0
    %568 = vmatprep.subr.mxu0 0.0
    %569 = vmatpush1.msra.mxu0 0.0
    %570 = vmatprep.subr.mxu0 0.0
    %571 = vmatpush1.msra.mxu0 0.0
    %572 = vmatprep.subr.mxu0 0.0
    %573 = vmatpush1.msra.mxu0 0.0
    %574 = vmatprep.subr.mxu0 0.0
    %575 = vmatpush1.msra.mxu0 0.0
    %576 = vmatprep.subr.mxu0 0.0
    %577 = vmatpush1.msra.mxu0 0.0
    %578 = vmatprep.subr.mxu0 0.0
    %579 = vmatpush1.msra.mxu0 0.0
    %580 = vmatprep.subr.mxu0 0.0
    %581 = vmatpush1.msra.mxu0 0.0
    %582 = vmatprep.subr.mxu0 0.0
    %583 = vmatpush1.msra.mxu0 0.0
    %584 = vmatprep.subr.mxu0 0.0
    %585 = vmatpush1.msra.mxu0 0.0
    %586 = vmatprep.subr.mxu0 0.0
    %587 = vmatpush1.msra.mxu0 0.0
    %588 = vmatprep.subr.mxu0 0.0
    %589 = vmatpush1.msra.mxu0 0.0
    %590 = vmatprep.subr.mxu0 0.0
    %591 = vmatpush1.msra.mxu0 0.0
    %592 = vmatprep.subr.mxu0 0.0
    %593 = vmatpush1.msra.mxu0 0.0
    %594 = vmatprep.subr.mxu0 0.0
    %595 = vmatpush1.msra.mxu0 0.0
    %596 = vmatprep.subr.mxu0 0.0
    %597 = vmatpush1.msra.mxu0 0.0
    %598 = vmatprep.subr.mxu0 0.0
    %599 = vmatpush1.msra.mxu0 0.0
    %600 = vmatprep.subr.mxu0 0.0
    %601 = vmatpush1.msra.mxu0 0.0
    %602 = vmatprep.subr.mxu0 0.0
    %603 = vmatpush1.msra.mxu0 0.0
    %604 = vmatprep.mubr.f32.mxu0 0.0
    %605 = vmatmul.mubr.f32.gmra.mrb[0].mxu0 %v538
    %v606 = vpop.f32.mrb[0].mxu0
    %v607 = vadd.f32 %v537, %v606
    %v608 = vpop.f32.mrb[0].mxu0
    %609 = vdwg.mxu0
    %v610 = vxor.u32 %v607, 2147483648
    %v611 = vmul.f32 %v610, 1.442695
    %v612 = vpow.pop %v611
    %v613 = vadd.f32 %v612, 1.0
    %v614 = vrcp.pop %v613
    %v615 = vmul.f32 1.0, %v614
    %v616 = vtanh.pop %v607
    %v617 = vmul.f32 %v615, %v524
    %619 = vrot.lane.b32.xlu0 %v616, 32
    %v620 = vpop.permute.xlu0 %619
    %v622 = vmul.f32 %v615, %v620
    %624 = vrot.lane.b32.xlu0 %v622, 32
    %v625 = vpop.permute.xlu0 %624
    %v627 = vadd.f32 %v617, %v625
    %v628 = vtanh.pop %v627
    %630 = vrot.lane.b32.xlu0 %v628, 32
    %v631 = vpop.permute.xlu0 %630
    %v633 = vmul.f32 %v615, %v631
    %635 = vrot.lane.b32.xlu0 %v633, 64
    %v636 = vpop.permute.xlu0 %635
    %s638 = scalar_lea.vmem [#allocation3], 12
    %639 = vst.msk [vmem:[%s638] sm:$0xf] %vm329, %v636
    %v640 = vld [vmem:[%s146] sm:$0xf]
    %v641 = vsel %vm227, %v636, 0
    %643 = vmatprep.subr.mxu0 0.0
    %644 = vmatpush1.msra.mxu0 %v53
    %645 = vmatprep.subr.mxu0 0.0
    %646 = vmatpush1.msra.mxu0 %v54
    %647 = vmatprep.subr.mxu0 0.0
    %648 = vmatpush1.msra.mxu0 %v55
    %649 = vmatprep.subr.mxu0 0.0
    %650 = vmatpush1.msra.mxu0 %v56
    %651 = vmatprep.subr.mxu0 0.0
    %652 = vmatpush1.msra.mxu0 0.0
    %653 = vmatprep.subr.mxu0 0.0
    %654 = vmatpush1.msra.mxu0 0.0
    %655 = vmatprep.subr.mxu0 0.0
    %656 = vmatpush1.msra.mxu0 0.0
    %657 = vmatprep.subr.mxu0 0.0
    %658 = vmatpush1.msra.mxu0 0.0
    %659 = vmatprep.subr.mxu0 0.0
    %660 = vmatpush1.msra.mxu0 0.0
    %661 = vmatprep.subr.mxu0 0.0
    %662 = vmatpush1.msra.mxu0 0.0
    %663 = vmatprep.subr.mxu0 0.0
    %664 = vmatpush1.msra.mxu0 0.0
    %665 = vmatprep.subr.mxu0 0.0
    %666 = vmatpush1.msra.mxu0 0.0
    %667 = vmatprep.subr.mxu0 0.0
    %668 = vmatpush1.msra.mxu0 0.0
    %669 = vmatprep.subr.mxu0 0.0
    %670 = vmatpush1.msra.mxu0 0.0
    %671 = vmatprep.subr.mxu0 0.0
    %672 = vmatpush1.msra.mxu0 0.0
    %673 = vmatprep.subr.mxu0 0.0
    %674 = vmatpush1.msra.mxu0 0.0
    %675 = vmatprep.subr.mxu0 0.0
    %676 = vmatpush1.msra.mxu0 0.0
    %677 = vmatprep.subr.mxu0 0.0
    %678 = vmatpush1.msra.mxu0 0.0
    %679 = vmatprep.subr.mxu0 0.0
    %680 = vmatpush1.msra.mxu0 0.0
    %681 = vmatprep.subr.mxu0 0.0
    %682 = vmatpush1.msra.mxu0 0.0
    %683 = vmatprep.subr.mxu0 0.0
    %684 = vmatpush1.msra.mxu0 0.0
    %685 = vmatprep.subr.mxu0 0.0
    %686 = vmatpush1.msra.mxu0 0.0
    %687 = vmatprep.subr.mxu0 0.0
    %688 = vmatpush1.msra.mxu0 0.0
    %689 = vmatprep.subr.mxu0 0.0
    %690 = vmatpush1.msra.mxu0 0.0
    %691 = vmatprep.subr.mxu0 0.0
    %692 = vmatpush1.msra.mxu0 0.0
    %693 = vmatprep.subr.mxu0 0.0
    %694 = vmatpush1.msra.mxu0 0.0
    %695 = vmatprep.subr.mxu0 0.0
    %696 = vmatpush1.msra.mxu0 0.0
    %697 = vmatprep.subr.mxu0 0.0
    %698 = vmatpush1.msra.mxu0 0.0
    %699 = vmatprep.subr.mxu0 0.0
    %700 = vmatpush1.msra.mxu0 0.0
    %701 = vmatprep.subr.mxu0 0.0
    %702 = vmatpush1.msra.mxu0 0.0
    %703 = vmatprep.subr.mxu0 0.0
    %704 = vmatpush1.msra.mxu0 0.0
    %705 = vmatprep.subr.mxu0 0.0
    %706 = vmatpush1.msra.mxu0 0.0
    %707 = vmatprep.mubr.f32.mxu0 0.0
    %708 = vmatmul.mubr.f32.gmra.mrb[0].mxu0 %v641
    %v709 = vpop.f32.mrb[0].mxu0
    %v710 = vadd.f32 %v640, %v709
    %v711 = vpop.f32.mrb[0].mxu0
    %712 = vdwg.mxu0
    %v713 = vxor.u32 %v710, 2147483648
    %v714 = vmul.f32 %v713, 1.442695
    %v715 = vpow.pop %v714
    %v716 = vadd.f32 %v715, 1.0
    %v717 = vrcp.pop %v716
    %v718 = vmul.f32 1.0, %v717
    %v719 = vtanh.pop %v710
    %v720 = vmul.f32 %v718, %v627
    %722 = vrot.lane.b32.xlu0 %v719, 32
    %v723 = vpop.permute.xlu0 %722
    %v725 = vmul.f32 %v718, %v723
    %727 = vrot.lane.b32.xlu0 %v725, 32
    %v728 = vpop.permute.xlu0 %727
    %v730 = vadd.f32 %v720, %v728
    %v731 = vtanh.pop %v730
    %733 = vrot.lane.b32.xlu0 %v731, 32
    %v734 = vpop.permute.xlu0 %733
    %v736 = vmul.f32 %v718, %v734
    %738 = vrot.lane.b32.xlu0 %v736, 64
    %v739 = vpop.permute.xlu0 %738
    %s741 = scalar_lea.vmem [#allocation3], 16
    %742 = vst.msk [vmem:[%s741] sm:$0xf] %vm329, %v739
    %v743 = vld [vmem:[%s167] sm:$0xf]
    %v744 = vsel %vm227, %v739, 0
    %746 = vmatprep.subr.mxu0 0.0
    %747 = vmatpush1.msra.mxu0 %v53
    %748 = vmatprep.subr.mxu0 0.0
    %749 = vmatpush1.msra.mxu0 %v54
    %750 = vmatprep.subr.mxu0 0.0
    %751 = vmatpush1.msra.mxu0 %v55
    %752 = vmatprep.subr.mxu0 0.0
    %753 = vmatpush1.msra.mxu0 %v56
    %754 = vmatprep.subr.mxu0 0.0
    %755 = vmatpush1.msra.mxu0 0.0
    %756 = vmatprep.subr.mxu0 0.0
    %757 = vmatpush1.msra.mxu0 0.0
    %758 = vmatprep.subr.mxu0 0.0
    %759 = vmatpush1.msra.mxu0 0.0
    %760 = vmatprep.subr.mxu0 0.0
    %761 = vmatpush1.msra.mxu0 0.0
    %762 = vmatprep.subr.mxu0 0.0
    %763 = vmatpush1.msra.mxu0 0.0
    %764 = vmatprep.subr.mxu0 0.0
    %765 = vmatpush1.msra.mxu0 0.0
    %766 = vmatprep.subr.mxu0 0.0
    %767 = vmatpush1.msra.mxu0 0.0
    %768 = vmatprep.subr.mxu0 0.0
    %769 = vmatpush1.msra.mxu0 0.0
    %770 = vmatprep.subr.mxu0 0.0
    %771 = vmatpush1.msra.mxu0 0.0
    %772 = vmatprep.subr.mxu0 0.0
    %773 = vmatpush1.msra.mxu0 0.0
    %774 = vmatprep.subr.mxu0 0.0
    %775 = vmatpush1.msra.mxu0 0.0
    %776 = vmatprep.subr.mxu0 0.0
    %777 = vmatpush1.msra.mxu0 0.0
    %778 = vmatprep.subr.mxu0 0.0
    %779 = vmatpush1.msra.mxu0 0.0
    %780 = vmatprep.subr.mxu0 0.0
    %781 = vmatpush1.msra.mxu0 0.0
    %782 = vmatprep.subr.mxu0 0.0
    %783 = vmatpush1.msra.mxu0 0.0
    %784 = vmatprep.subr.mxu0 0.0
    %785 = vmatpush1.msra.mxu0 0.0
    %786 = vmatprep.subr.mxu0 0.0
    %787 = vmatpush1.msra.mxu0 0.0
    %788 = vmatprep.subr.mxu0 0.0
    %789 = vmatpush1.msra.mxu0 0.0
    %790 = vmatprep.subr.mxu0 0.0
    %791 = vmatpush1.msra.mxu0 0.0
    %792 = vmatprep.subr.mxu0 0.0
    %793 = vmatpush1.msra.mxu0 0.0
    %794 = vmatprep.subr.mxu0 0.0
    %795 = vmatpush1.msra.mxu0 0.0
    %796 = vmatprep.subr.mxu0 0.0
    %797 = vmatpush1.msra.mxu0 0.0
    %798 = vmatprep.subr.mxu0 0.0
    %799 = vmatpush1.msra.mxu0 0.0
    %800 = vmatprep.subr.mxu0 0.0
    %801 = vmatpush1.msra.mxu0 0.0
    %802 = vmatprep.subr.mxu0 0.0
    %803 = vmatpush1.msra.mxu0 0.0
    %804 = vmatprep.subr.mxu0 0.0
    %805 = vmatpush1.msra.mxu0 0.0
    %806 = vmatprep.subr.mxu0 0.0
    %807 = vmatpush1.msra.mxu0 0.0
    %808 = vmatprep.subr.mxu0 0.0
    %809 = vmatpush1.msra.mxu0 0.0
    %810 = vmatprep.mubr.f32.mxu0 0.0
    %811 = vmatmul.mubr.f32.gmra.mrb[0].mxu0 %v744
    %v812 = vpop.f32.mrb[0].mxu0
    %v813 = vadd.f32 %v743, %v812
    %v814 = vpop.f32.mrb[0].mxu0
    %815 = vdwg.mxu0
    %v816 = vxor.u32 %v813, 2147483648
    %v817 = vmul.f32 %v816, 1.442695
    %v818 = vpow.pop %v817
    %v819 = vadd.f32 %v818, 1.0
    %v820 = vrcp.pop %v819
    %v821 = vmul.f32 1.0, %v820
    %v822 = vtanh.pop %v813
    %v823 = vmul.f32 %v821, %v730
    %825 = vrot.lane.b32.xlu0 %v822, 32
    %v826 = vpop.permute.xlu0 %825
    %v828 = vmul.f32 %v821, %v826
    %830 = vrot.lane.b32.xlu0 %v828, 32
    %v831 = vpop.permute.xlu0 %830
    %v833 = vadd.f32 %v823, %v831
    %v834 = vtanh.pop %v833
    %836 = vrot.lane.b32.xlu0 %v834, 32
    %v837 = vpop.permute.xlu0 %836
    %v839 = vmul.f32 %v821, %v837
    %841 = vrot.lane.b32.xlu0 %v839, 64
    %v842 = vpop.permute.xlu0 %841
    %s844 = scalar_lea.vmem [#allocation3], 20
    %845 = vst.msk [vmem:[%s844] sm:$0xf] %vm329, %v842
    %v846 = vld [vmem:[%s188] sm:$0xf]
    %v847 = vsel %vm227, %v842, 0
    %849 = vmatprep.subr.mxu0 0.0
    %850 = vmatpush1.msra.mxu0 %v53
    %851 = vmatprep.subr.mxu0 0.0
    %852 = vmatpush1.msra.mxu0 %v54
    %853 = vmatprep.subr.mxu0 0.0
    %854 = vmatpush1.msra.mxu0 %v55
    %855 = vmatprep.subr.mxu0 0.0
    %856 = vmatpush1.msra.mxu0 %v56
    %857 = vmatprep.subr.mxu0 0.0
    %858 = vmatpush1.msra.mxu0 0.0
    %859 = vmatprep.subr.mxu0 0.0
    %860 = vmatpush1.msra.mxu0 0.0
    %861 = vmatprep.subr.mxu0 0.0
    %862 = vmatpush1.msra.mxu0 0.0
    %863 = vmatprep.subr.mxu0 0.0
    %864 = vmatpush1.msra.mxu0 0.0
    %865 = vmatprep.subr.mxu0 0.0
    %866 = vmatpush1.msra.mxu0 0.0
    %867 = vmatprep.subr.mxu0 0.0
    %868 = vmatpush1.msra.mxu0 0.0
    %869 = vmatprep.subr.mxu0 0.0
    %870 = vmatpush1.msra.mxu0 0.0
    %871 = vmatprep.subr.mxu0 0.0
    %872 = vmatpush1.msra.mxu0 0.0
    %873 = vmatprep.subr.mxu0 0.0
    %874 = vmatpush1.msra.mxu0 0.0
    %875 = vmatprep.subr.mxu0 0.0
    %876 = vmatpush1.msra.mxu0 0.0
    %877 = vmatprep.subr.mxu0 0.0
    %878 = vmatpush1.msra.mxu0 0.0
    %879 = vmatprep.subr.mxu0 0.0
    %880 = vmatpush1.msra.mxu0 0.0
    %881 = vmatprep.subr.mxu0 0.0
    %882 = vmatpush1.msra.mxu0 0.0
    %883 = vmatprep.subr.mxu0 0.0
    %884 = vmatpush1.msra.mxu0 0.0
    %885 = vmatprep.subr.mxu0 0.0
    %886 = vmatpush1.msra.mxu0 0.0
    %887 = vmatprep.subr.mxu0 0.0
    %888 = vmatpush1.msra.mxu0 0.0
    %889 = vmatprep.subr.mxu0 0.0
    %890 = vmatpush1.msra.mxu0 0.0
    %891 = vmatprep.subr.mxu0 0.0
    %892 = vmatpush1.msra.mxu0 0.0
    %893 = vmatprep.subr.mxu0 0.0
    %894 = vmatpush1.msra.mxu0 0.0
    %895 = vmatprep.subr.mxu0 0.0
    %896 = vmatpush1.msra.mxu0 0.0
    %897 = vmatprep.subr.mxu0 0.0
    %898 = vmatpush1.msra.mxu0 0.0
    %899 = vmatprep.subr.mxu0 0.0
    %900 = vmatpush1.msra.mxu0 0.0
    %901 = vmatprep.subr.mxu0 0.0
    %902 = vmatpush1.msra.mxu0 0.0
    %903 = vmatprep.subr.mxu0 0.0
    %904 = vmatpush1.msra.mxu0 0.0
    %905 = vmatprep.subr.mxu0 0.0
    %906 = vmatpush1.msra.mxu0 0.0
    %907 = vmatprep.subr.mxu0 0.0
    %908 = vmatpush1.msra.mxu0 0.0
    %909 = vmatprep.subr.mxu0 0.0
    %910 = vmatpush1.msra.mxu0 0.0
    %911 = vmatprep.subr.mxu0 0.0
    %912 = vmatpush1.msra.mxu0 0.0
    %913 = vmatprep.mubr.f32.mxu0 0.0
    %914 = vmatmul.mubr.f32.gmra.mrb[0].mxu0 %v847
    %v915 = vpop.f32.mrb[0].mxu0
    %v916 = vadd.f32 %v846, %v915
    %v917 = vpop.f32.mrb[0].mxu0
    %918 = vdwg.mxu0
    %v919 = vxor.u32 %v916, 2147483648
    %v920 = vmul.f32 %v919, 1.442695
    %v921 = vpow.pop %v920
    %v922 = vadd.f32 %v921, 1.0
    %v923 = vrcp.pop %v922
    %v924 = vmul.f32 1.0, %v923
    %v925 = vtanh.pop %v916
    %v926 = vmul.f32 %v924, %v833
    %928 = vrot.lane.b32.xlu0 %v925, 32
    %v929 = vpop.permute.xlu0 %928
    %v931 = vmul.f32 %v924, %v929
    %933 = vrot.lane.b32.xlu0 %v931, 32
    %v934 = vpop.permute.xlu0 %933
    %v936 = vadd.f32 %v926, %v934
    %v937 = vtanh.pop %v936
    %939 = vrot.lane.b32.xlu0 %v937, 32
    %v940 = vpop.permute.xlu0 %939
    %v942 = vmul.f32 %v924, %v940
    %944 = vrot.lane.b32.xlu0 %v942, 64
    %v945 = vpop.permute.xlu0 %944
    %s947 = scalar_lea.vmem [#allocation3], 24
    %948 = vst.msk [vmem:[%s947] sm:$0xf] %vm329, %v945
    %v949 = vld [vmem:[%s209] sm:$0xf]
    %v950 = vsel %vm227, %v945, 0
    %952 = vmatprep.subr.mxu0 0.0
    %953 = vmatpush1.msra.mxu0 %v53
    %954 = vmatprep.subr.mxu0 0.0
    %955 = vmatpush1.msra.mxu0 %v54
    %956 = vmatprep.subr.mxu0 0.0
    %957 = vmatpush1.msra.mxu0 %v55
    %958 = vmatprep.subr.mxu0 0.0
    %959 = vmatpush1.msra.mxu0 %v56
    %960 = vmatprep.subr.mxu0 0.0
    %961 = vmatpush1.msra.mxu0 0.0
    %962 = vmatprep.subr.mxu0 0.0
    %963 = vmatpush1.msra.mxu0 0.0
    %964 = vmatprep.subr.mxu0 0.0
    %965 = vmatpush1.msra.mxu0 0.0
    %966 = vmatprep.subr.mxu0 0.0
    %967 = vmatpush1.msra.mxu0 0.0
    %968 = vmatprep.subr.mxu0 0.0
    %969 = vmatpush1.msra.mxu0 0.0
    %970 = vmatprep.subr.mxu0 0.0
    %971 = vmatpush1.msra.mxu0 0.0
    %972 = vmatprep.subr.mxu0 0.0
    %973 = vmatpush1.msra.mxu0 0.0
    %974 = vmatprep.subr.mxu0 0.0
    %975 = vmatpush1.msra.mxu0 0.0
    %976 = vmatprep.subr.mxu0 0.0
    %977 = vmatpush1.msra.mxu0 0.0
    %978 = vmatprep.subr.mxu0 0.0
    %979 = vmatpush1.msra.mxu0 0.0
    %980 = vmatprep.subr.mxu0 0.0
    %981 = vmatpush1.msra.mxu0 0.0
    %982 = vmatprep.subr.mxu0 0.0
    %983 = vmatpush1.msra.mxu0 0.0
    %984 = vmatprep.subr.mxu0 0.0
    %985 = vmatpush1.msra.mxu0 0.0
    %986 = vmatprep.subr.mxu0 0.0
    %987 = vmatpush1.msra.mxu0 0.0
    %988 = vmatprep.subr.mxu0 0.0
    %989 = vmatpush1.msra.mxu0 0.0
    %990 = vmatprep.subr.mxu0 0.0
    %991 = vmatpush1.msra.mxu0 0.0
    %992 = vmatprep.subr.mxu0 0.0
    %993 = vmatpush1.msra.mxu0 0.0
    %994 = vmatprep.subr.mxu0 0.0
    %995 = vmatpush1.msra.mxu0 0.0
    %996 = vmatprep.subr.mxu0 0.0
    %997 = vmatpush1.msra.mxu0 0.0
    %998 = vmatprep.subr.mxu0 0.0
    %999 = vmatpush1.msra.mxu0 0.0
    %1000 = vmatprep.subr.mxu0 0.0
    %1001 = vmatpush1.msra.mxu0 0.0
    %1002 = vmatprep.subr.mxu0 0.0
    %1003 = vmatpush1.msra.mxu0 0.0
    %1004 = vmatprep.subr.mxu0 0.0
    %1005 = vmatpush1.msra.mxu0 0.0
    %1006 = vmatprep.subr.mxu0 0.0
    %1007 = vmatpush1.msra.mxu0 0.0
    %1008 = vmatprep.subr.mxu0 0.0
    %1009 = vmatpush1.msra.mxu0 0.0
    %1010 = vmatprep.subr.mxu0 0.0
    %1011 = vmatpush1.msra.mxu0 0.0
    %1012 = vmatprep.subr.mxu0 0.0
    %1013 = vmatpush1.msra.mxu0 0.0
    %1014 = vmatprep.subr.mxu0 0.0
    %1015 = vmatpush1.msra.mxu0 0.0
    %1016 = vmatprep.mubr.f32.mxu0 0.0
    %1017 = vmatmul.mubr.f32.gmra.mrb[0].mxu0 %v950
    %v1018 = vpop.f32.mrb[0].mxu0
    %v1019 = vadd.f32 %v949, %v1018
    %v1020 = vpop.f32.mrb[0].mxu0
    %1021 = vdwg.mxu0
    %v1022 = vxor.u32 %v1019, 2147483648
    %v1023 = vmul.f32 %v1022, 1.442695
    %v1024 = vpow.pop %v1023
    %v1025 = vadd.f32 %v1024, 1.0
    %v1026 = vrcp.pop %v1025
    %v1027 = vmul.f32 1.0, %v1026
    %v1028 = vtanh.pop %v1019
    %v1029 = vmul.f32 %v1027, %v936
    %1031 = vrot.lane.b32.xlu0 %v1028, 32
    %v1032 = vpop.permute.xlu0 %1031
    %v1034 = vmul.f32 %v1027, %v1032
    %1036 = vrot.lane.b32.xlu0 %v1034, 32
    %v1037 = vpop.permute.xlu0 %1036
    %v1039 = vadd.f32 %v1029, %v1037
    %v1040 = vtanh.pop %v1039
    %1042 = vrot.lane.b32.xlu0 %v1040, 32
    %v1043 = vpop.permute.xlu0 %1042
    %v1045 = vmul.f32 %v1027, %v1043
    %1047 = vrot.lane.b32.xlu0 %v1045, 64
    %v1048 = vpop.permute.xlu0 %1047
    %s1050 = scalar_lea.vmem [#allocation3], 28
    %1051 = vst.msk [vmem:[%s1050] sm:$0xf] %vm329, %v1048
    %v1052 = vld [vmem:[#allocation3] sm:$0xf]
    %v1053 = vstv %s58
    %v1055 = vsel %vm227, %v57, 0
    %v1058 = vsel %vm227, %v1052, 0
    %1060 = vmatprep.subr.mxu0 0.0
    %1061 = vmatpush1.xpose.msra.mxu0 %v1058
    %1062 = vmatprep.subr.mxu0 0.0
    %1063 = vmatpush1.xpose.msra.mxu0 0.0
    %1064 = vmatprep.subr.mxu0 0.0
    %1065 = vmatpush1.xpose.msra.mxu0 0.0
    %1066 = vmatprep.subr.mxu0 0.0
    %1067 = vmatpush1.xpose.msra.mxu0 0.0
    %1068 = vmatprep.subr.mxu0 0.0
    %1069 = vmatpush1.xpose.msra.mxu0 0.0
    %1070 = vmatprep.subr.mxu0 0.0
    %1071 = vmatpush1.xpose.msra.mxu0 0.0
    %1072 = vmatprep.subr.mxu0 0.0
    %1073 = vmatpush1.xpose.msra.mxu0 0.0
    %1074 = vmatprep.subr.mxu0 0.0
    %1075 = vmatpush1.xpose.msra.mxu0 0.0
    %1076 = vmatprep.subr.mxu0 0.0
    %1077 = vmatpush1.xpose.msra.mxu0 0.0
    %1078 = vmatprep.subr.mxu0 0.0
    %1079 = vmatpush1.xpose.msra.mxu0 0.0
    %1080 = vmatprep.subr.mxu0 0.0
    %1081 = vmatpush1.xpose.msra.mxu0 0.0
    %1082 = vmatprep.subr.mxu0 0.0
    %1083 = vmatpush1.xpose.msra.mxu0 0.0
    %1084 = vmatprep.subr.mxu0 0.0
    %1085 = vmatpush1.xpose.msra.mxu0 0.0
    %1086 = vmatprep.subr.mxu0 0.0
    %1087 = vmatpush1.xpose.msra.mxu0 0.0
    %1088 = vmatprep.subr.mxu0 0.0
    %1089 = vmatpush1.xpose.msra.mxu0 0.0
    %1090 = vmatprep.subr.mxu0 0.0
    %1091 = vmatpush1.xpose.msra.mxu0 0.0
    %1092 = vmatprep.subr.mxu0 0.0
    %1093 = vmatpush1.xpose.msra.mxu0 0.0
    %1094 = vmatprep.subr.mxu0 0.0
    %1095 = vmatpush1.xpose.msra.mxu0 0.0
    %1096 = vmatprep.subr.mxu0 0.0
    %1097 = vmatpush1.xpose.msra.mxu0 0.0
    %1098 = vmatprep.subr.mxu0 0.0
    %1099 = vmatpush1.xpose.msra.mxu0 0.0
    %1100 = vmatprep.subr.mxu0 0.0
    %1101 = vmatpush1.xpose.msra.mxu0 0.0
    %1102 = vmatprep.subr.mxu0 0.0
    %1103 = vmatpush1.xpose.msra.mxu0 0.0
    %1104 = vmatprep.subr.mxu0 0.0
    %1105 = vmatpush1.xpose.msra.mxu0 0.0
    %1106 = vmatprep.subr.mxu0 0.0
    %1107 = vmatpush1.xpose.msra.mxu0 0.0
    %1108 = vmatprep.subr.mxu0 0.0
    %1109 = vmatpush1.xpose.msra.mxu0 0.0
    %1110 = vmatprep.subr.mxu0 0.0
    %1111 = vmatpush1.xpose.msra.mxu0 0.0
    %1112 = vmatprep.subr.mxu0 0.0
    %1113 = vmatpush1.xpose.msra.mxu0 0.0
    %1114 = vmatprep.subr.mxu0 0.0
    %1115 = vmatpush1.xpose.msra.mxu0 0.0
    %1116 = vmatprep.subr.mxu0 0.0
    %1117 = vmatpush1.xpose.msra.mxu0 0.0
    %1118 = vmatprep.subr.mxu0 0.0
    %1119 = vmatpush1.xpose.msra.mxu0 0.0
    %1120 = vmatprep.subr.mxu0 0.0
    %1121 = vmatpush1.xpose.msra.mxu0 0.0
    %1122 = vmatprep.subr.mxu0 0.0
    %1123 = vmatpush1.xpose.msra.mxu0 0.0
    %1124 = vmatprep.mubr.f32.mxu0 0.0
    %1125 = vmatmul.mubr.f32.gmra.mrb[0].mxu0 %v1055
    %v1126 = vpop.f32.mrb[0].mxu0
    %v1127 = vadd.f32 %v1053, %v1126
    %v1128 = vpop.f32.mrb[0].mxu0
    %1129 = vdwg.mxu0
    %vm1130 = vcmask 24576
    %1131 = vst.msk [vmem:[%s6] sm:$0x1] %vm1130, %v1127
    %v1132 = vld [vmem:[%s432] sm:$0xf]
    %v1134 = vsel %vm227, %v1132, 0
    %1136 = vmatprep.subr.mxu0 0.0
    %1137 = vmatpush1.xpose.msra.mxu0 %v1134
    %1138 = vmatprep.subr.mxu0 0.0
    %1139 = vmatpush1.xpose.msra.mxu0 0.0
    %1140 = vmatprep.subr.mxu0 0.0
    %1141 = vmatpush1.xpose.msra.mxu0 0.0
    %1142 = vmatprep.subr.mxu0 0.0
    %1143 = vmatpush1.xpose.msra.mxu0 0.0
    %1144 = vmatprep.subr.mxu0 0.0
    %1145 = vmatpush1.xpose.msra.mxu0 0.0
    %1146 = vmatprep.subr.mxu0 0.0
    %1147 = vmatpush1.xpose.msra.mxu0 0.0
    %1148 = vmatprep.subr.mxu0 0.0
    %1149 = vmatpush1.xpose.msra.mxu0 0.0
    %1150 = vmatprep.subr.mxu0 0.0
    %1151 = vmatpush1.xpose.msra.mxu0 0.0
    %1152 = vmatprep.subr.mxu0 0.0
    %1153 = vmatpush1.xpose.msra.mxu0 0.0
    %1154 = vmatprep.subr.mxu0 0.0
    %1155 = vmatpush1.xpose.msra.mxu0 0.0
    %1156 = vmatprep.subr.mxu0 0.0
    %1157 = vmatpush1.xpose.msra.mxu0 0.0
    %1158 = vmatprep.subr.mxu0 0.0
    %1159 = vmatpush1.xpose.msra.mxu0 0.0
    %1160 = vmatprep.subr.mxu0 0.0
    %1161 = vmatpush1.xpose.msra.mxu0 0.0
    %1162 = vmatprep.subr.mxu0 0.0
    %1163 = vmatpush1.xpose.msra.mxu0 0.0
    %1164 = vmatprep.subr.mxu0 0.0
    %1165 = vmatpush1.xpose.msra.mxu0 0.0
    %1166 = vmatprep.subr.mxu0 0.0
    %1167 = vmatpush1.xpose.msra.mxu0 0.0
    %1168 = vmatprep.subr.mxu0 0.0
    %1169 = vmatpush1.xpose.msra.mxu0 0.0
    %1170 = vmatprep.subr.mxu0 0.0
    %1171 = vmatpush1.xpose.msra.mxu0 0.0
    %1172 = vmatprep.subr.mxu0 0.0
    %1173 = vmatpush1.xpose.msra.mxu0 0.0
    %1174 = vmatprep.subr.mxu0 0.0
    %1175 = vmatpush1.xpose.msra.mxu0 0.0
    %1176 = vmatprep.subr.mxu0 0.0
    %1177 = vmatpush1.xpose.msra.mxu0 0.0
    %1178 = vmatprep.subr.mxu0 0.0
    %1179 = vmatpush1.xpose.msra.mxu0 0.0
    %1180 = vmatprep.subr.mxu0 0.0
    %1181 = vmatpush1.xpose.msra.mxu0 0.0
    %1182 = vmatprep.subr.mxu0 0.0
    %1183 = vmatpush1.xpose.msra.mxu0 0.0
    %1184 = vmatprep.subr.mxu0 0.0
    %1185 = vmatpush1.xpose.msra.mxu0 0.0
    %1186 = vmatprep.subr.mxu0 0.0
    %1187 = vmatpush1.xpose.msra.mxu0 0.0
    %1188 = vmatprep.subr.mxu0 0.0
    %1189 = vmatpush1.xpose.msra.mxu0 0.0
    %1190 = vmatprep.subr.mxu0 0.0
    %1191 = vmatpush1.xpose.msra.mxu0 0.0
    %1192 = vmatprep.subr.mxu0 0.0
    %1193 = vmatpush1.xpose.msra.mxu0 0.0
    %1194 = vmatprep.subr.mxu0 0.0
    %1195 = vmatpush1.xpose.msra.mxu0 0.0
    %1196 = vmatprep.subr.mxu0 0.0
    %1197 = vmatpush1.xpose.msra.mxu0 0.0
    %1198 = vmatprep.subr.mxu0 0.0
    %1199 = vmatpush1.xpose.msra.mxu0 0.0
    %1200 = vmatprep.mubr.f32.mxu0 0.0
    %1201 = vmatmul.mubr.f32.gmra.mrb[0].mxu0 %v1055
    %v1202 = vpop.f32.mrb[0].mxu0
    %v1203 = vadd.f32 %v1053, %v1202
    %v1204 = vpop.f32.mrb[0].mxu0
    %1205 = vdwg.mxu0
    %1206 = vst.msk [vmem:[%s6 + $0x1] sm:$0x1] %vm1130, %v1203
    %v1207 = vld [vmem:[%s535] sm:$0xf]
    %v1209 = vsel %vm227, %v1207, 0
    %1211 = vmatprep.subr.mxu0 0.0
    %1212 = vmatpush1.xpose.msra.mxu0 %v1209
    %1213 = vmatprep.subr.mxu0 0.0
    %1214 = vmatpush1.xpose.msra.mxu0 0.0
    %1215 = vmatprep.subr.mxu0 0.0
    %1216 = vmatpush1.xpose.msra.mxu0 0.0
    %1217 = vmatprep.subr.mxu0 0.0
    %1218 = vmatpush1.xpose.msra.mxu0 0.0
    %1219 = vmatprep.subr.mxu0 0.0
    %1220 = vmatpush1.xpose.msra.mxu0 0.0
    %1221 = vmatprep.subr.mxu0 0.0
    %1222 = vmatpush1.xpose.msra.mxu0 0.0
    %1223 = vmatprep.subr.mxu0 0.0
    %1224 = vmatpush1.xpose.msra.mxu0 0.0
    %1225 = vmatprep.subr.mxu0 0.0
    %1226 = vmatpush1.xpose.msra.mxu0 0.0
    %1227 = vmatprep.subr.mxu0 0.0
    %1228 = vmatpush1.xpose.msra.mxu0 0.0
    %1229 = vmatprep.subr.mxu0 0.0
    %1230 = vmatpush1.xpose.msra.mxu0 0.0
    %1231 = vmatprep.subr.mxu0 0.0
    %1232 = vmatpush1.xpose.msra.mxu0 0.0
    %1233 = vmatprep.subr.mxu0 0.0
    %1234 = vmatpush1.xpose.msra.mxu0 0.0
    %1235 = vmatprep.subr.mxu0 0.0
    %1236 = vmatpush1.xpose.msra.mxu0 0.0
    %1237 = vmatprep.subr.mxu0 0.0
    %1238 = vmatpush1.xpose.msra.mxu0 0.0
    %1239 = vmatprep.subr.mxu0 0.0
    %1240 = vmatpush1.xpose.msra.mxu0 0.0
    %1241 = vmatprep.subr.mxu0 0.0
    %1242 = vmatpush1.xpose.msra.mxu0 0.0
    %1243 = vmatprep.subr.mxu0 0.0
    %1244 = vmatpush1.xpose.msra.mxu0 0.0
    %1245 = vmatprep.subr.mxu0 0.0
    %1246 = vmatpush1.xpose.msra.mxu0 0.0
    %1247 = vmatprep.subr.mxu0 0.0
    %1248 = vmatpush1.xpose.msra.mxu0 0.0
    %1249 = vmatprep.subr.mxu0 0.0
    %1250 = vmatpush1.xpose.msra.mxu0 0.0
    %1251 = vmatprep.subr.mxu0 0.0
    %1252 = vmatpush1.xpose.msra.mxu0 0.0
    %1253 = vmatprep.subr.mxu0 0.0
    %1254 = vmatpush1.xpose.msra.mxu0 0.0
    %1255 = vmatprep.subr.mxu0 0.0
    %1256 = vmatpush1.xpose.msra.mxu0 0.0
    %1257 = vmatprep.subr.mxu0 0.0
    %1258 = vmatpush1.xpose.msra.mxu0 0.0
    %1259 = vmatprep.subr.mxu0 0.0
    %1260 = vmatpush1.xpose.msra.mxu0 0.0
    %1261 = vmatprep.subr.mxu0 0.0
    %1262 = vmatpush1.xpose.msra.mxu0 0.0
    %1263 = vmatprep.subr.mxu0 0.0
    %1264 = vmatpush1.xpose.msra.mxu0 0.0
    %1265 = vmatprep.subr.mxu0 0.0
    %1266 = vmatpush1.xpose.msra.mxu0 0.0
    %1267 = vmatprep.subr.mxu0 0.0
    %1268 = vmatpush1.xpose.msra.mxu0 0.0
    %1269 = vmatprep.subr.mxu0 0.0
    %1270 = vmatpush1.xpose.msra.mxu0 0.0
    %1271 = vmatprep.subr.mxu0 0.0
    %1272 = vmatpush1.xpose.msra.mxu0 0.0
    %1273 = vmatprep.subr.mxu0 0.0
    %1274 = vmatpush1.xpose.msra.mxu0 0.0
    %1275 = vmatprep.mubr.f32.mxu0 0.0
    %1276 = vmatmul.mubr.f32.gmra.mrb[0].mxu0 %v1055
    %v1277 = vpop.f32.mrb[0].mxu0
    %v1278 = vadd.f32 %v1053, %v1277
    %v1279 = vpop.f32.mrb[0].mxu0
    %1280 = vdwg.mxu0
    %1281 = vst.msk [vmem:[%s6 + $0x2] sm:$0x1] %vm1130, %v1278
    %v1282 = vld [vmem:[%s638] sm:$0xf]
    %v1284 = vsel %vm227, %v1282, 0
    %1286 = vmatprep.subr.mxu0 0.0
    %1287 = vmatpush1.xpose.msra.mxu0 %v1284
    %1288 = vmatprep.subr.mxu0 0.0
    %1289 = vmatpush1.xpose.msra.mxu0 0.0
    %1290 = vmatprep.subr.mxu0 0.0
    %1291 = vmatpush1.xpose.msra.mxu0 0.0
    %1292 = vmatprep.subr.mxu0 0.0
    %1293 = vmatpush1.xpose.msra.mxu0 0.0
    %1294 = vmatprep.subr.mxu0 0.0
    %1295 = vmatpush1.xpose.msra.mxu0 0.0
    %1296 = vmatprep.subr.mxu0 0.0
    %1297 = vmatpush1.xpose.msra.mxu0 0.0
    %1298 = vmatprep.subr.mxu0 0.0
    %1299 = vmatpush1.xpose.msra.mxu0 0.0
    %1300 = vmatprep.subr.mxu0 0.0
    %1301 = vmatpush1.xpose.msra.mxu0 0.0
    %1302 = vmatprep.subr.mxu0 0.0
    %1303 = vmatpush1.xpose.msra.mxu0 0.0
    %1304 = vmatprep.subr.mxu0 0.0
    %1305 = vmatpush1.xpose.msra.mxu0 0.0
    %1306 = vmatprep.subr.mxu0 0.0
    %1307 = vmatpush1.xpose.msra.mxu0 0.0
    %1308 = vmatprep.subr.mxu0 0.0
    %1309 = vmatpush1.xpose.msra.mxu0 0.0
    %1310 = vmatprep.subr.mxu0 0.0
    %1311 = vmatpush1.xpose.msra.mxu0 0.0
    %1312 = vmatprep.subr.mxu0 0.0
    %1313 = vmatpush1.xpose.msra.mxu0 0.0
    %1314 = vmatprep.subr.mxu0 0.0
    %1315 = vmatpush1.xpose.msra.mxu0 0.0
    %1316 = vmatprep.subr.mxu0 0.0
    %1317 = vmatpush1.xpose.msra.mxu0 0.0
    %1318 = vmatprep.subr.mxu0 0.0
    %1319 = vmatpush1.xpose.msra.mxu0 0.0
    %1320 = vmatprep.subr.mxu0 0.0
    %1321 = vmatpush1.xpose.msra.mxu0 0.0
    %1322 = vmatprep.subr.mxu0 0.0
    %1323 = vmatpush1.xpose.msra.mxu0 0.0
    %1324 = vmatprep.subr.mxu0 0.0
    %1325 = vmatpush1.xpose.msra.mxu0 0.0
    %1326 = vmatprep.subr.mxu0 0.0
    %1327 = vmatpush1.xpose.msra.mxu0 0.0
    %1328 = vmatprep.subr.mxu0 0.0
    %1329 = vmatpush1.xpose.msra.mxu0 0.0
    %1330 = vmatprep.subr.mxu0 0.0
    %1331 = vmatpush1.xpose.msra.mxu0 0.0
    %1332 = vmatprep.subr.mxu0 0.0
    %1333 = vmatpush1.xpose.msra.mxu0 0.0
    %1334 = vmatprep.subr.mxu0 0.0
    %1335 = vmatpush1.xpose.msra.mxu0 0.0
    %1336 = vmatprep.subr.mxu0 0.0
    %1337 = vmatpush1.xpose.msra.mxu0 0.0
    %1338 = vmatprep.subr.mxu0 0.0
    %1339 = vmatpush1.xpose.msra.mxu0 0.0
    %1340 = vmatprep.subr.mxu0 0.0
    %1341 = vmatpush1.xpose.msra.mxu0 0.0
    %1342 = vmatprep.subr.mxu0 0.0
    %1343 = vmatpush1.xpose.msra.mxu0 0.0
    %1344 = vmatprep.subr.mxu0 0.0
    %1345 = vmatpush1.xpose.msra.mxu0 0.0
    %1346 = vmatprep.subr.mxu0 0.0
    %1347 = vmatpush1.xpose.msra.mxu0 0.0
    %1348 = vmatprep.subr.mxu0 0.0
    %1349 = vmatpush1.xpose.msra.mxu0 0.0
    %1350 = vmatprep.mubr.f32.mxu0 0.0
    %1351 = vmatmul.mubr.f32.gmra.mrb[0].mxu0 %v1055
    %v1352 = vpop.f32.mrb[0].mxu0
    %v1353 = vadd.f32 %v1053, %v1352
    %v1354 = vpop.f32.mrb[0].mxu0
    %1355 = vdwg.mxu0
    %1356 = vst.msk [vmem:[%s6 + $0x3] sm:$0x1] %vm1130, %v1353
    %v1357 = vld [vmem:[%s741] sm:$0xf]
    %v1359 = vsel %vm227, %v1357, 0
    %1361 = vmatprep.subr.mxu0 0.0
    %1362 = vmatpush1.xpose.msra.mxu0 %v1359
    %1363 = vmatprep.subr.mxu0 0.0
    %1364 = vmatpush1.xpose.msra.mxu0 0.0
    %1365 = vmatprep.subr.mxu0 0.0
    %1366 = vmatpush1.xpose.msra.mxu0 0.0
    %1367 = vmatprep.subr.mxu0 0.0
    %1368 = vmatpush1.xpose.msra.mxu0 0.0
    %1369 = vmatprep.subr.mxu0 0.0
    %1370 = vmatpush1.xpose.msra.mxu0 0.0
    %1371 = vmatprep.subr.mxu0 0.0
    %1372 = vmatpush1.xpose.msra.mxu0 0.0
    %1373 = vmatprep.subr.mxu0 0.0
    %1374 = vmatpush1.xpose.msra.mxu0 0.0
    %1375 = vmatprep.subr.mxu0 0.0
    %1376 = vmatpush1.xpose.msra.mxu0 0.0
    %1377 = vmatprep.subr.mxu0 0.0
    %1378 = vmatpush1.xpose.msra.mxu0 0.0
    %1379 = vmatprep.subr.mxu0 0.0
    %1380 = vmatpush1.xpose.msra.mxu0 0.0
    %1381 = vmatprep.subr.mxu0 0.0
    %1382 = vmatpush1.xpose.msra.mxu0 0.0
    %1383 = vmatprep.subr.mxu0 0.0
    %1384 = vmatpush1.xpose.msra.mxu0 0.0
    %1385 = vmatprep.subr.mxu0 0.0
    %1386 = vmatpush1.xpose.msra.mxu0 0.0
    %1387 = vmatprep.subr.mxu0 0.0
    %1388 = vmatpush1.xpose.msra.mxu0 0.0
    %1389 = vmatprep.subr.mxu0 0.0
    %1390 = vmatpush1.xpose.msra.mxu0 0.0
    %1391 = vmatprep.subr.mxu0 0.0
    %1392 = vmatpush1.xpose.msra.mxu0 0.0
    %1393 = vmatprep.subr.mxu0 0.0
    %1394 = vmatpush1.xpose.msra.mxu0 0.0
    %1395 = vmatprep.subr.mxu0 0.0
    %1396 = vmatpush1.xpose.msra.mxu0 0.0
    %1397 = vmatprep.subr.mxu0 0.0
    %1398 = vmatpush1.xpose.msra.mxu0 0.0
    %1399 = vmatprep.subr.mxu0 0.0
    %1400 = vmatpush1.xpose.msra.mxu0 0.0
    %1401 = vmatprep.subr.mxu0 0.0
    %1402 = vmatpush1.xpose.msra.mxu0 0.0
    %1403 = vmatprep.subr.mxu0 0.0
    %1404 = vmatpush1.xpose.msra.mxu0 0.0
    %1405 = vmatprep.subr.mxu0 0.0
    %1406 = vmatpush1.xpose.msra.mxu0 0.0
    %1407 = vmatprep.subr.mxu0 0.0
    %1408 = vmatpush1.xpose.msra.mxu0 0.0
    %1409 = vmatprep.subr.mxu0 0.0
    %1410 = vmatpush1.xpose.msra.mxu0 0.0
    %1411 = vmatprep.subr.mxu0 0.0
    %1412 = vmatpush1.xpose.msra.mxu0 0.0
    %1413 = vmatprep.subr.mxu0 0.0
    %1414 = vmatpush1.xpose.msra.mxu0 0.0
    %1415 = vmatprep.subr.mxu0 0.0
    %1416 = vmatpush1.xpose.msra.mxu0 0.0
    %1417 = vmatprep.subr.mxu0 0.0
    %1418 = vmatpush1.xpose.msra.mxu0 0.0
    %1419 = vmatprep.subr.mxu0 0.0
    %1420 = vmatpush1.xpose.msra.mxu0 0.0
    %1421 = vmatprep.subr.mxu0 0.0
    %1422 = vmatpush1.xpose.msra.mxu0 0.0
    %1423 = vmatprep.subr.mxu0 0.0
    %1424 = vmatpush1.xpose.msra.mxu0 0.0
    %1425 = vmatprep.mubr.f32.mxu0 0.0
    %1426 = vmatmul.mubr.f32.gmra.mrb[0].mxu0 %v1055
    %v1427 = vpop.f32.mrb[0].mxu0
    %v1428 = vadd.f32 %v1053, %v1427
    %v1429 = vpop.f32.mrb[0].mxu0
    %1430 = vdwg.mxu0
    %1431 = vst.msk [vmem:[%s6 + $0x4] sm:$0x1] %vm1130, %v1428
    %v1432 = vld [vmem:[%s844] sm:$0xf]
    %v1434 = vsel %vm227, %v1432, 0
    %1436 = vmatprep.subr.mxu0 0.0
    %1437 = vmatpush1.xpose.msra.mxu0 %v1434
    %1438 = vmatprep.subr.mxu0 0.0
    %1439 = vmatpush1.xpose.msra.mxu0 0.0
    %1440 = vmatprep.subr.mxu0 0.0
    %1441 = vmatpush1.xpose.msra.mxu0 0.0
    %1442 = vmatprep.subr.mxu0 0.0
    %1443 = vmatpush1.xpose.msra.mxu0 0.0
    %1444 = vmatprep.subr.mxu0 0.0
    %1445 = vmatpush1.xpose.msra.mxu0 0.0
    %1446 = vmatprep.subr.mxu0 0.0
    %1447 = vmatpush1.xpose.msra.mxu0 0.0
    %1448 = vmatprep.subr.mxu0 0.0
    %1449 = vmatpush1.xpose.msra.mxu0 0.0
    %1450 = vmatprep.subr.mxu0 0.0
    %1451 = vmatpush1.xpose.msra.mxu0 0.0
    %1452 = vmatprep.subr.mxu0 0.0
    %1453 = vmatpush1.xpose.msra.mxu0 0.0
    %1454 = vmatprep.subr.mxu0 0.0
    %1455 = vmatpush1.xpose.msra.mxu0 0.0
    %1456 = vmatprep.subr.mxu0 0.0
    %1457 = vmatpush1.xpose.msra.mxu0 0.0
    %1458 = vmatprep.subr.mxu0 0.0
    %1459 = vmatpush1.xpose.msra.mxu0 0.0
    %1460 = vmatprep.subr.mxu0 0.0
    %1461 = vmatpush1.xpose.msra.mxu0 0.0
    %1462 = vmatprep.subr.mxu0 0.0
    %1463 = vmatpush1.xpose.msra.mxu0 0.0
    %1464 = vmatprep.subr.mxu0 0.0
    %1465 = vmatpush1.xpose.msra.mxu0 0.0
    %1466 = vmatprep.subr.mxu0 0.0
    %1467 = vmatpush1.xpose.msra.mxu0 0.0
    %1468 = vmatprep.subr.mxu0 0.0
    %1469 = vmatpush1.xpose.msra.mxu0 0.0
    %1470 = vmatprep.subr.mxu0 0.0
    %1471 = vmatpush1.xpose.msra.mxu0 0.0
    %1472 = vmatprep.subr.mxu0 0.0
    %1473 = vmatpush1.xpose.msra.mxu0 0.0
    %1474 = vmatprep.subr.mxu0 0.0
    %1475 = vmatpush1.xpose.msra.mxu0 0.0
    %1476 = vmatprep.subr.mxu0 0.0
    %1477 = vmatpush1.xpose.msra.mxu0 0.0
    %1478 = vmatprep.subr.mxu0 0.0
    %1479 = vmatpush1.xpose.msra.mxu0 0.0
    %1480 = vmatprep.subr.mxu0 0.0
    %1481 = vmatpush1.xpose.msra.mxu0 0.0
    %1482 = vmatprep.subr.mxu0 0.0
    %1483 = vmatpush1.xpose.msra.mxu0 0.0
    %1484 = vmatprep.subr.mxu0 0.0
    %1485 = vmatpush1.xpose.msra.mxu0 0.0
    %1486 = vmatprep.subr.mxu0 0.0
    %1487 = vmatpush1.xpose.msra.mxu0 0.0
    %1488 = vmatprep.subr.mxu0 0.0
    %1489 = vmatpush1.xpose.msra.mxu0 0.0
    %1490 = vmatprep.subr.mxu0 0.0
    %1491 = vmatpush1.xpose.msra.mxu0 0.0
    %1492 = vmatprep.subr.mxu0 0.0
    %1493 = vmatpush1.xpose.msra.mxu0 0.0
    %1494 = vmatprep.subr.mxu0 0.0
    %1495 = vmatpush1.xpose.msra.mxu0 0.0
    %1496 = vmatprep.subr.mxu0 0.0
    %1497 = vmatpush1.xpose.msra.mxu0 0.0
    %1498 = vmatprep.subr.mxu0 0.0
    %1499 = vmatpush1.xpose.msra.mxu0 0.0
    %1500 = vmatprep.mubr.f32.mxu0 0.0
    %1501 = vmatmul.mubr.f32.gmra.mrb[0].mxu0 %v1055
    %v1502 = vpop.f32.mrb[0].mxu0
    %v1503 = vadd.f32 %v1053, %v1502
    %v1504 = vpop.f32.mrb[0].mxu0
    %1505 = vdwg.mxu0
    %1506 = vst.msk [vmem:[%s6 + $0x5] sm:$0x1] %vm1130, %v1503
    %v1507 = vld [vmem:[%s947] sm:$0xf]
    %v1509 = vsel %vm227, %v1507, 0
    %1511 = vmatprep.subr.mxu0 0.0
    %1512 = vmatpush1.xpose.msra.mxu0 %v1509
    %1513 = vmatprep.subr.mxu0 0.0
    %1514 = vmatpush1.xpose.msra.mxu0 0.0
    %1515 = vmatprep.subr.mxu0 0.0
    %1516 = vmatpush1.xpose.msra.mxu0 0.0
    %1517 = vmatprep.subr.mxu0 0.0
    %1518 = vmatpush1.xpose.msra.mxu0 0.0
    %1519 = vmatprep.subr.mxu0 0.0
    %1520 = vmatpush1.xpose.msra.mxu0 0.0
    %1521 = vmatprep.subr.mxu0 0.0
    %1522 = vmatpush1.xpose.msra.mxu0 0.0
    %1523 = vmatprep.subr.mxu0 0.0
    %1524 = vmatpush1.xpose.msra.mxu0 0.0
    %1525 = vmatprep.subr.mxu0 0.0
    %1526 = vmatpush1.xpose.msra.mxu0 0.0
    %1527 = vmatprep.subr.mxu0 0.0
    %1528 = vmatpush1.xpose.msra.mxu0 0.0
    %1529 = vmatprep.subr.mxu0 0.0
    %1530 = vmatpush1.xpose.msra.mxu0 0.0
    %1531 = vmatprep.subr.mxu0 0.0
    %1532 = vmatpush1.xpose.msra.mxu0 0.0
    %1533 = vmatprep.subr.mxu0 0.0
    %1534 = vmatpush1.xpose.msra.mxu0 0.0
    %1535 = vmatprep.subr.mxu0 0.0
    %1536 = vmatpush1.xpose.msra.mxu0 0.0
    %1537 = vmatprep.subr.mxu0 0.0
    %1538 = vmatpush1.xpose.msra.mxu0 0.0
    %1539 = vmatprep.subr.mxu0 0.0
    %1540 = vmatpush1.xpose.msra.mxu0 0.0
    %1541 = vmatprep.subr.mxu0 0.0
    %1542 = vmatpush1.xpose.msra.mxu0 0.0
    %1543 = vmatprep.subr.mxu0 0.0
    %1544 = vmatpush1.xpose.msra.mxu0 0.0
    %1545 = vmatprep.subr.mxu0 0.0
    %1546 = vmatpush1.xpose.msra.mxu0 0.0
    %1547 = vmatprep.subr.mxu0 0.0
    %1548 = vmatpush1.xpose.msra.mxu0 0.0
    %1549 = vmatprep.subr.mxu0 0.0
    %1550 = vmatpush1.xpose.msra.mxu0 0.0
    %1551 = vmatprep.subr.mxu0 0.0
    %1552 = vmatpush1.xpose.msra.mxu0 0.0
    %1553 = vmatprep.subr.mxu0 0.0
    %1554 = vmatpush1.xpose.msra.mxu0 0.0
    %1555 = vmatprep.subr.mxu0 0.0
    %1556 = vmatpush1.xpose.msra.mxu0 0.0
    %1557 = vmatprep.subr.mxu0 0.0
    %1558 = vmatpush1.xpose.msra.mxu0 0.0
    %1559 = vmatprep.subr.mxu0 0.0
    %1560 = vmatpush1.xpose.msra.mxu0 0.0
    %1561 = vmatprep.subr.mxu0 0.0
    %1562 = vmatpush1.xpose.msra.mxu0 0.0
    %1563 = vmatprep.subr.mxu0 0.0
    %1564 = vmatpush1.xpose.msra.mxu0 0.0
    %1565 = vmatprep.subr.mxu0 0.0
    %1566 = vmatpush1.xpose.msra.mxu0 0.0
    %1567 = vmatprep.subr.mxu0 0.0
    %1568 = vmatpush1.xpose.msra.mxu0 0.0
    %1569 = vmatprep.subr.mxu0 0.0
    %1570 = vmatpush1.xpose.msra.mxu0 0.0
    %1571 = vmatprep.subr.mxu0 0.0
    %1572 = vmatpush1.xpose.msra.mxu0 0.0
    %1573 = vmatprep.subr.mxu0 0.0
    %1574 = vmatpush1.xpose.msra.mxu0 0.0
    %1575 = vmatprep.mubr.f32.mxu0 0.0
    %1576 = vmatmul.mubr.f32.gmra.mrb[0].mxu0 %v1055
    %v1577 = vpop.f32.mrb[0].mxu0
    %v1578 = vadd.f32 %v1053, %v1577
    %v1579 = vpop.f32.mrb[0].mxu0
    %1580 = vdwg.mxu0
    %1581 = vst.msk [vmem:[%s6 + $0x6] sm:$0x1] %vm1130, %v1578
    %v1582 = vld [vmem:[%s1050] sm:$0xf]
    %v1584 = vsel %vm227, %v1582, 0
    %1586 = vmatprep.subr.mxu0 0.0
    %1587 = vmatpush1.xpose.msra.mxu0 %v1584
    %1588 = vmatprep.subr.mxu0 0.0
    %1589 = vmatpush1.xpose.msra.mxu0 0.0
    %1590 = vmatprep.subr.mxu0 0.0
    %1591 = vmatpush1.xpose.msra.mxu0 0.0
    %1592 = vmatprep.subr.mxu0 0.0
    %1593 = vmatpush1.xpose.msra.mxu0 0.0
    %1594 = vmatprep.subr.mxu0 0.0
    %1595 = vmatpush1.xpose.msra.mxu0 0.0
    %1596 = vmatprep.subr.mxu0 0.0
    %1597 = vmatpush1.xpose.msra.mxu0 0.0
    %1598 = vmatprep.subr.mxu0 0.0
    %1599 = vmatpush1.xpose.msra.mxu0 0.0
    %1600 = vmatprep.subr.mxu0 0.0
    %1601 = vmatpush1.xpose.msra.mxu0 0.0
    %1602 = vmatprep.subr.mxu0 0.0
    %1603 = vmatpush1.xpose.msra.mxu0 0.0
    %1604 = vmatprep.subr.mxu0 0.0
    %1605 = vmatpush1.xpose.msra.mxu0 0.0
    %1606 = vmatprep.subr.mxu0 0.0
    %1607 = vmatpush1.xpose.msra.mxu0 0.0
    %1608 = vmatprep.subr.mxu0 0.0
    %1609 = vmatpush1.xpose.msra.mxu0 0.0
    %1610 = vmatprep.subr.mxu0 0.0
    %1611 = vmatpush1.xpose.msra.mxu0 0.0
    %1612 = vmatprep.subr.mxu0 0.0
    %1613 = vmatpush1.xpose.msra.mxu0 0.0
    %1614 = vmatprep.subr.mxu0 0.0
    %1615 = vmatpush1.xpose.msra.mxu0 0.0
    %1616 = vmatprep.subr.mxu0 0.0
    %1617 = vmatpush1.xpose.msra.mxu0 0.0
    %1618 = vmatprep.subr.mxu0 0.0
    %1619 = vmatpush1.xpose.msra.mxu0 0.0
    %1620 = vmatprep.subr.mxu0 0.0
    %1621 = vmatpush1.xpose.msra.mxu0 0.0
    %1622 = vmatprep.subr.mxu0 0.0
    %1623 = vmatpush1.xpose.msra.mxu0 0.0
    %1624 = vmatprep.subr.mxu0 0.0
    %1625 = vmatpush1.xpose.msra.mxu0 0.0
    %1626 = vmatprep.subr.mxu0 0.0
    %1627 = vmatpush1.xpose.msra.mxu0 0.0
    %1628 = vmatprep.subr.mxu0 0.0
    %1629 = vmatpush1.xpose.msra.mxu0 0.0
    %1630 = vmatprep.subr.mxu0 0.0
    %1631 = vmatpush1.xpose.msra.mxu0 0.0
    %1632 = vmatprep.subr.mxu0 0.0
    %1633 = vmatpush1.xpose.msra.mxu0 0.0
    %1634 = vmatprep.subr.mxu0 0.0
    %1635 = vmatpush1.xpose.msra.mxu0 0.0
    %1636 = vmatprep.subr.mxu0 0.0
    %1637 = vmatpush1.xpose.msra.mxu0 0.0
    %1638 = vmatprep.subr.mxu0 0.0
    %1639 = vmatpush1.xpose.msra.mxu0 0.0
    %1640 = vmatprep.subr.mxu0 0.0
    %1641 = vmatpush1.xpose.msra.mxu0 0.0
    %1642 = vmatprep.subr.mxu0 0.0
    %1643 = vmatpush1.xpose.msra.mxu0 0.0
    %1644 = vmatprep.subr.mxu0 0.0
    %1645 = vmatpush1.xpose.msra.mxu0 0.0
    %1646 = vmatprep.subr.mxu0 0.0
    %1647 = vmatpush1.xpose.msra.mxu0 0.0
    %1648 = vmatprep.subr.mxu0 0.0
    %1649 = vmatpush1.xpose.msra.mxu0 0.0
    %1650 = vmatprep.mubr.f32.mxu0 0.0
    %1651 = vmatmul.mubr.f32.gmra.mrb[0].mxu0 %v1055
    %v1652 = vpop.f32.mrb[0].mxu0
    %v1653 = vadd.f32 %v1053, %v1652
    %v1654 = vpop.f32.mrb[0].mxu0
    %1655 = vdwg.mxu0
    %1656 = vst.msk [vmem:[%s6 + $0x7] sm:$0x1] %vm1130, %v1653
    // Predicated region
    $region34: #{net_forward.1} parent=1 // pred_check
      _
    $region35: #{net_forward.1} parent=1 // pred_check_branch
      %1658 = sbr.rel (0) target = $region37
    $region36: #{net_forward.1} parent=1 // pred_region
      _
    $region37: #{net_forward.1} parent=1 // pred_fallthru
      _
    // Predicated region
    $region38: #{net_forward.1} parent=1 // pred_check
      _
    $region39: #{net_forward.1} parent=1 // pred_check_branch
      %1660 = sbr.rel (0) target = $region41
    $region40: #{net_forward.1} parent=1 // pred_region
      _
    $region41: #{net_forward.1} parent=1 // pred_fallthru
      _
    %1661 = vsyncpa [#allocation6], 1
    %1662 = vsyncpa [#allocation7], 1

</llo_original>
